<compile_context>
chip_gen: v5e
topology: v5e:2x2
jax: 0.10.0
libtpu: 0.0.40
codegen_flags: <defaults>
</compile_context>

<pallas_src>
import functools

import jax
import jax.numpy as jnp
from jax.experimental import pallas as pl
from jax.experimental.pallas import tpu as pltpu


def _round_up(x, m):
    return (x + m - 1) // m * m


def _pad_to(x, rows, cols):
    return jnp.pad(x, ((0, rows - x.shape[0]), (0, cols - x.shape[1])))


def _fused_kernel(adj_ref, h_ref, invdeg_ref, w1_ref, w2_ref, wfc_ref,
                  out_ref, x1_ref, colsum_ref, *, tm):
    layer = pl.program_id(0)
    rt = pl.program_id(1)
    last_rt = pl.num_programs(1) - 1
    row0 = pl.multiple_of(rt * tm, tm)

    a_tile = adj_ref[...]          # (tm, Np) bf16  0/1 adjacency rows
    inv_deg = invdeg_ref[...]      # (tm, 1)  f32   1/indeg (0 for isolated/pad)

    @pl.when(layer == 0)
    def _layer1():
        h_full = h_ref[...]                                        # (Np, Fp) bf16
        neigh = jnp.dot(a_tile, h_full,
                        preferred_element_type=jnp.float32) * inv_deg
        self_rows = h_ref[pl.ds(row0, tm), :]                      # (tm, Fp) bf16
        cat = jnp.concatenate(
            [self_rows, neigh.astype(jnp.bfloat16)], axis=-1)      # (tm, 2Fp)
        x1 = jnp.dot(cat, w1_ref[...], preferred_element_type=jnp.float32)
        x1 = jnp.maximum(x1, 0.0)                                  # ReLU
        x1_ref[pl.ds(row0, tm), :] = x1.astype(jnp.bfloat16)

    @pl.when(layer == 1)
    def _layer2():
        @pl.when(rt == 0)
        def _init():
            colsum_ref[...] = jnp.zeros_like(colsum_ref)

        x1_full = x1_ref[...]                                      # (Np, Dp) bf16
        neigh = jnp.dot(a_tile, x1_full,
                        preferred_element_type=jnp.float32) * inv_deg
        self_rows = x1_ref[pl.ds(row0, tm), :]                     # (tm, Dp) bf16
        cat = jnp.concatenate(
            [self_rows, neigh.astype(jnp.bfloat16)], axis=-1)      # (tm, 2Dp)
        x2 = jnp.dot(cat, w2_ref[...], preferred_element_type=jnp.float32)
        colsum_ref[...] += jnp.sum(x2, axis=0, keepdims=True)      # (1, Dp)

        @pl.when(rt == last_rt)
        def _readout():
            # mean_nodes is folded into wfc (already divided by true N);
            # fc1 reduces along lanes, sigmoid via EUP exp + approx reciprocal.
            logit = jnp.sum(colsum_ref[...] * wfc_ref[...],
                            axis=-1, keepdims=True)                # (1, 1)
            out_ref[...] = pl.reciprocal(1.0 + jnp.exp(-logit), approx=True)


def net_graphsage_forward(adj, features, params, *, tm=128):
    """adj[v, u] = 1.0 iff edge u -> v (in-neighbor matrix). features: (N, F)."""
    n, f = features.shape
    d = params["w1_self"].shape[1]
    np_ = _round_up(max(n, tm), tm)
    fp = _round_up(f, 128)
    dp = _round_up(d, 128)

    # Inverse in-degree (zero for isolated / padded nodes) -- mean aggregation.
    indeg = jnp.sum(adj, axis=1, keepdims=True)
    inv_indeg = jnp.where(indeg > 0, 1.0 / jnp.maximum(indeg, 1.0), 0.0)
    inv_indeg = _pad_to(inv_indeg.astype(jnp.float32), np_, 1)

    adj_p = _pad_to(adj, np_, np_).astype(jnp.bfloat16)
    h_p = _pad_to(features, np_, fp).astype(jnp.bfloat16)

    # Stacked (self ; neigh) weights, zero-padded to lane-dense shapes.
    w1 = jnp.concatenate([_pad_to(params["w1_self"], fp, dp),
                          _pad_to(params["w1_neigh"], fp, dp)],
                         axis=0).astype(jnp.bfloat16)               # (2Fp, Dp)
    w2 = jnp.concatenate([_pad_to(params["w2_self"], dp, dp),
                          _pad_to(params["w2_neigh"], dp, dp)],
                         axis=0).astype(jnp.bfloat16)               # (2Dp, Dp)
    # Fold the 1/N of dgl.mean_nodes into the fc weight; store as a (1, Dp) row.
    wfc = _pad_to(params["w_fc1"] / float(n), dp, 1).T.astype(jnp.float32)

    n_row_tiles = np_ // tm
    kernel = functools.partial(_fused_kernel, tm=tm)

    flops = (2 * np_ * np_ * (fp + dp)            # A @ H  /  A @ X1
             + 2 * np_ * 2 * fp * dp              # [h|neigh] @ W1
             + 2 * np_ * 2 * dp * dp)             # [x1|neigh] @ W2
    bytes_accessed = (2 * adj_p.size * 2 + h_p.size * 2
                      + (w1.size + w2.size) * 2 + inv_indeg.size * 4)

    out = pl.pallas_call(
        kernel,
        out_shape=jax.ShapeDtypeStruct((1, 1), jnp.float32),
        grid=(2, n_row_tiles),
        in_specs=[
            pl.BlockSpec((tm, np_), lambda l, t: (t, 0)),      # adjacency row tile
            pl.BlockSpec((np_, fp), lambda l, t: (0, 0)),      # features (resident)
            pl.BlockSpec((tm, 1), lambda l, t: (t, 0)),        # inv in-degree tile
            pl.BlockSpec((2 * fp, dp), lambda l, t: (0, 0)),   # stacked W1
            pl.BlockSpec((2 * dp, dp), lambda l, t: (0, 0)),   # stacked W2
            pl.BlockSpec((1, dp), lambda l, t: (0, 0)),        # fc row (mean folded)
        ],
        out_specs=pl.BlockSpec((1, 1), lambda l, t: (0, 0)),
        scratch_shapes=[
            pltpu.VMEM((np_, dp), jnp.bfloat16),   # x1 = relu(conv1(...)), persists
            pltpu.VMEM((1, dp), jnp.float32),      # column-sum accumulator of x2
        ],
        compiler_params=pltpu.CompilerParams(
            dimension_semantics=("arbitrary", "arbitrary")),
        cost_estimate=pl.CostEstimate(flops=flops, transcendentals=1,
                                      bytes_accessed=bytes_accessed),
    )(adj_p, h_p, inv_indeg, w1, w2, wfc)
    return out


def init_params(key, num_features, dim):
    ks = jax.random.split(key, 5)

    def lin(k, fan_in, fan_out):
        bound = 1.0 / jnp.sqrt(jnp.float32(fan_in))
        return jax.random.uniform(k, (fan_in, fan_out), jnp.float32,
                                  minval=-bound, maxval=bound)

    return {
        "w1_self": lin(ks[0], num_features, dim),
        "w1_neigh": lin(ks[1], num_features, dim),
        "w2_self": lin(ks[2], dim, dim),
        "w2_neigh": lin(ks[3], dim, dim),
        "w_fc1": lin(ks[4], dim, 1),
    }


def reference_forward(adj, features, params):
    """Pure-JAX f32 reference (mirrors the PyTorch/DGL forward)."""
    indeg = jnp.sum(adj, axis=1, keepdims=True)
    a_norm = jnp.where(indeg > 0, adj / jnp.maximum(indeg, 1.0), 0.0)
    x = features @ params["w1_self"] + (a_norm @ features) @ params["w1_neigh"]
    x = jnp.maximum(x, 0.0)
    x = x @ params["w2_self"] + (a_norm @ x) @ params["w2_neigh"]
    m = jnp.mean(x, axis=0, keepdims=True)
    return jax.nn.sigmoid(m @ params["w_fc1"])


if __name__ == "__main__":
    num_nodes = 32
    num_features = 16
    dim = 10  # SAGEConv hidden dim (module default)

    key = jax.random.PRNGKey(0)
    k_feat, k_adj, k_param = jax.random.split(key, 3)

    features = jax.random.normal(k_feat, (num_nodes, num_features), jnp.float32)
    # deterministic random directed graph (adj[v, u] = 1 iff edge u -> v)
    adj = (jax.random.uniform(k_adj, (num_nodes, num_nodes)) < 0.2).astype(jnp.float32)

    params = init_params(k_param, num_features, dim)

    out = net_graphsage_forward(adj, features, params)
    out = jax.block_until_ready(out)

    ref = jax.block_until_ready(reference_forward(adj, features, params))

    assert out.shape == (1, 1)
    assert bool(jnp.all((out >= 0.0) & (out <= 1.0)))
    assert bool(jnp.allclose(out, ref, atol=2e-2, rtol=2e-2)), (out, ref)
    print("KERNEL_OK")
</pallas_src>

<mosaic_0001>
module attributes {stable_mosaic.version = 11 : i64} {
  func.func @_fused_kernel(%arg0: i32, %arg1: i32, %arg2: memref<128x128xbf16, #tpu.memory_space<vmem>>, %arg3: memref<128x128xbf16, #tpu.memory_space<vmem>>, %arg4: memref<128x1xf32, #tpu.memory_space<vmem>>, %arg5: memref<256x128xbf16, #tpu.memory_space<vmem>>, %arg6: memref<256x128xbf16, #tpu.memory_space<vmem>>, %arg7: memref<1x128xf32, #tpu.memory_space<vmem>>, %arg8: memref<1x1xf32, #tpu.memory_space<vmem>>, %arg9: memref<128x128xbf16, #tpu.memory_space<vmem>>, %arg10: memref<1x128xf32, #tpu.memory_space<vmem>>) attributes {dimension_semantics = [#tpu.dimension_semantics<arbitrary>, #tpu.dimension_semantics<arbitrary>], iteration_bounds = array<i64: 2, 1>, scalar_prefetch = 0 : i64, scratch_operands = 2 : i64, tpu.core_type = #tpu.core_type<tc>, window_params = [{transform_indices = @transform_0, window_bounds = array<i64: 128, 128>}, {pipeline_mode = #tpu.pipeline_mode<synchronous>, transform_indices = @transform_1, window_bounds = array<i64: 128, 128>}, {transform_indices = @transform_2, window_bounds = array<i64: 128, 1>}, {pipeline_mode = #tpu.pipeline_mode<synchronous>, transform_indices = @transform_3, window_bounds = array<i64: 256, 128>}, {pipeline_mode = #tpu.pipeline_mode<synchronous>, transform_indices = @transform_4, window_bounds = array<i64: 256, 128>}, {pipeline_mode = #tpu.pipeline_mode<synchronous>, transform_indices = @transform_5, window_bounds = array<i64: 1, 128>}, {pipeline_mode = #tpu.pipeline_mode<synchronous>, transform_indices = @transform_6, window_bounds = array<i64: 1, 1>}]} {
    %c128_i32 = arith.constant 128 : i32
    %0 = arith.muli %arg1, %c128_i32 : i32
    %1 = tpu.assume_multiple %0, 128 : i32
    %c0 = arith.constant 0 : index
    %c0_0 = arith.constant 0 : index
    %2 = vector.load %arg2[%c0, %c0_0] : memref<128x128xbf16, #tpu.memory_space<vmem>>, vector<128x128xbf16>
    %c0_1 = arith.constant 0 : index
    %c0_2 = arith.constant 0 : index
    %3 = vector.load %arg4[%c0_1, %c0_2] : memref<128x1xf32, #tpu.memory_space<vmem>>, vector<128x1xf32>
    %c0_i32 = arith.constant 0 : i32
    %4 = arith.cmpi eq, %arg0, %c0_i32 : i32
    %5 = arith.extui %4 : i1 to i32
    %c0_i32_3 = arith.constant 0 : i32
    %6 = arith.cmpi ne, %5, %c0_i32_3 : i32
    scf.if %6 {
      %c0_5 = arith.constant 0 : index
      %c0_6 = arith.constant 0 : index
      %10 = vector.load %arg3[%c0_5, %c0_6] : memref<128x128xbf16, #tpu.memory_space<vmem>>, vector<128x128xbf16>
      %cst = arith.constant dense<0.000000e+00> : vector<128x128xf32>
      %11 = tpu.matmul %2, %10, %cst {dimension_numbers = #tpu.dot_dimension_numbers<[1], [0], [0], [1], [0, 0, 1, 1], [], []>} : vector<128x128xbf16>, vector<128x128xbf16>, vector<128x128xf32> -> vector<128x128xf32>
      %12 = vector.broadcast %3 : vector<128x1xf32> to vector<128x128xf32>
      %13 = arith.mulf %11, %12 : vector<128x128xf32>
      %14 = arith.index_cast %1 : i32 to index
      %c0_7 = arith.constant 0 : index
      %15 = vector.load %arg3[%14, %c0_7] : memref<128x128xbf16, #tpu.memory_space<vmem>>, vector<128x128xbf16>
      %16 = arith.truncf %13 : vector<128x128xf32> to vector<128x128xbf16>
      %17 = tpu.concatenate %15, %16 in 1 : vector<128x128xbf16>, vector<128x128xbf16> -> vector<128x256xbf16>
      %c0_8 = arith.constant 0 : index
      %c0_9 = arith.constant 0 : index
      %18 = vector.load %arg5[%c0_8, %c0_9] : memref<256x128xbf16, #tpu.memory_space<vmem>>, vector<256x128xbf16>
      %cst_10 = arith.constant dense<0.000000e+00> : vector<128x128xf32>
      %19 = tpu.matmul %17, %18, %cst_10 {dimension_numbers = #tpu.dot_dimension_numbers<[1], [0], [0], [1], [0, 0, 1, 1], [], []>} : vector<128x256xbf16>, vector<256x128xbf16>, vector<128x128xf32> -> vector<128x128xf32>
      %cst_11 = arith.constant 0.000000e+00 : f32
      %20 = vector.broadcast %cst_11 : f32 to vector<128x128xf32>
      %21 = arith.maximumf %19, %20 : vector<128x128xf32>
      %22 = arith.truncf %21 : vector<128x128xf32> to vector<128x128xbf16>
      %23 = arith.index_cast %1 : i32 to index
      %c0_12 = arith.constant 0 : index
      %24 = vector.load %arg9[%23, %c0_12] : memref<128x128xbf16, #tpu.memory_space<vmem>>, vector<128x128xbf16>
      tpu.vector_store %arg9[%23, %c0_12], %22 {strides = array<i32>} : memref<128x128xbf16, #tpu.memory_space<vmem>>, vector<128x128xbf16>,
    } else {
    }
    %c1_i32 = arith.constant 1 : i32
    %7 = arith.cmpi eq, %arg0, %c1_i32 : i32
    %8 = arith.extui %7 : i1 to i32
    %c0_i32_4 = arith.constant 0 : i32
    %9 = arith.cmpi ne, %8, %c0_i32_4 : i32
    scf.if %9 {
      %c0_i32_5 = arith.constant 0 : i32
      %10 = arith.cmpi eq, %arg1, %c0_i32_5 : i32
      %11 = arith.extui %10 : i1 to i32
      %c0_i32_6 = arith.constant 0 : i32
      %12 = arith.cmpi ne, %11, %c0_i32_6 : i32
      scf.if %12 {
        %cst_20 = arith.constant 0.000000e+00 : f32
        %31 = vector.broadcast %cst_20 : f32 to vector<1x128xf32>
        %c0_21 = arith.constant 0 : index
        %c0_22 = arith.constant 0 : index
        %32 = vector.load %arg10[%c0_21, %c0_22] : memref<1x128xf32, #tpu.memory_space<vmem>>, vector<1x128xf32>
        tpu.vector_store %arg10[%c0_21, %c0_22], %31 {strides = array<i32>} : memref<1x128xf32, #tpu.memory_space<vmem>>, vector<1x128xf32>,
      } else {
      }
      %c0_7 = arith.constant 0 : index
      %c0_8 = arith.constant 0 : index
      %13 = vector.load %arg9[%c0_7, %c0_8] : memref<128x128xbf16, #tpu.memory_space<vmem>>, vector<128x128xbf16>
      %cst = arith.constant dense<0.000000e+00> : vector<128x128xf32>
      %14 = tpu.matmul %2, %13, %cst {dimension_numbers = #tpu.dot_dimension_numbers<[1], [0], [0], [1], [0, 0, 1, 1], [], []>} : vector<128x128xbf16>, vector<128x128xbf16>, vector<128x128xf32> -> vector<128x128xf32>
      %15 = vector.broadcast %3 : vector<128x1xf32> to vector<128x128xf32>
      %16 = arith.mulf %14, %15 : vector<128x128xf32>
      %17 = arith.index_cast %1 : i32 to index
      %c0_9 = arith.constant 0 : index
      %18 = vector.load %arg9[%17, %c0_9] : memref<128x128xbf16, #tpu.memory_space<vmem>>, vector<128x128xbf16>
      %19 = arith.truncf %16 : vector<128x128xf32> to vector<128x128xbf16>
      %20 = tpu.concatenate %18, %19 in 1 : vector<128x128xbf16>, vector<128x128xbf16> -> vector<128x256xbf16>
      %c0_10 = arith.constant 0 : index
      %c0_11 = arith.constant 0 : index
      %21 = vector.load %arg6[%c0_10, %c0_11] : memref<256x128xbf16, #tpu.memory_space<vmem>>, vector<256x128xbf16>
      %cst_12 = arith.constant dense<0.000000e+00> : vector<128x128xf32>
      %22 = tpu.matmul %20, %21, %cst_12 {dimension_numbers = #tpu.dot_dimension_numbers<[1], [0], [0], [1], [0, 0, 1, 1], [], []>} : vector<128x256xbf16>, vector<256x128xbf16>, vector<128x128xf32> -> vector<128x128xf32>
      %c0_13 = arith.constant 0 : index
      %c0_14 = arith.constant 0 : index
      %23 = vector.load %arg10[%c0_13, %c0_14] : memref<1x128xf32, #tpu.memory_space<vmem>>, vector<1x128xf32>
      %cst_15 = arith.constant dense<0.000000e+00> : vector<128xf32>
      %24 = vector.multi_reduction <add>, %22, %cst_15 [0] : vector<128x128xf32> to vector<128xf32>
      %25 = vector.shape_cast %24 : vector<128xf32> to vector<1x128xf32>
      %26 = arith.addf %23, %25 : vector<1x128xf32>
      %c0_16 = arith.constant 0 : index
      %c0_17 = arith.constant 0 : index
      %27 = vector.load %arg10[%c0_16, %c0_17] : memref<1x128xf32, #tpu.memory_space<vmem>>, vector<1x128xf32>
      tpu.vector_store %arg10[%c0_16, %c0_17], %26 {strides = array<i32>} : memref<1x128xf32, #tpu.memory_space<vmem>>, vector<1x128xf32>,
      %c0_i32_18 = arith.constant 0 : i32
      %28 = arith.cmpi eq, %arg1, %c0_i32_18 : i32
      %29 = arith.extui %28 : i1 to i32
      %c0_i32_19 = arith.constant 0 : i32
      %30 = arith.cmpi ne, %29, %c0_i32_19 : i32
      scf.if %30 {
        %c0_20 = arith.constant 0 : index
        %c0_21 = arith.constant 0 : index
        %31 = vector.load %arg10[%c0_20, %c0_21] : memref<1x128xf32, #tpu.memory_space<vmem>>, vector<1x128xf32>
        %c0_22 = arith.constant 0 : index
        %c0_23 = arith.constant 0 : index
        %32 = vector.load %arg7[%c0_22, %c0_23] : memref<1x128xf32, #tpu.memory_space<vmem>>, vector<1x128xf32>
        %33 = arith.mulf %31, %32 : vector<1x128xf32>
        %cst_24 = arith.constant dense<0.000000e+00> : vector<1xf32>
        %34 = vector.multi_reduction <add>, %33, %cst_24 [1] : vector<1x128xf32> to vector<1xf32>
        %35 = vector.shape_cast %34 : vector<1xf32> to vector<1x1xf32>
        %cst_25 = arith.constant 0.000000e+00 : f32
        %36 = vector.broadcast %cst_25 : f32 to vector<1x1xf32>
        %37 = arith.subf %36, %35 : vector<1x1xf32>
        %38 = math.exp %37 : vector<1x1xf32>
        %cst_26 = arith.constant 1.000000e+00 : f32
        %39 = vector.broadcast %cst_26 : f32 to vector<1x1xf32>
        %40 = arith.addf %39, %38 : vector<1x1xf32>
        %41 = tpu.reciprocal %40 {approx = true} : vector<1x1xf32> -> vector<1x1xf32>
        %c0_27 = arith.constant 0 : index
        %c0_28 = arith.constant 0 : index
        %42 = vector.load %arg8[%c0_27, %c0_28] : memref<1x1xf32, #tpu.memory_space<vmem>>, vector<1x1xf32>
        tpu.vector_store %arg8[%c0_27, %c0_28], %41 {strides = array<i32>} : memref<1x1xf32, #tpu.memory_space<vmem>>, vector<1x1xf32>,
      } else {
      }
    } else {
    }
    return
  }
  func.func @transform_0(%arg0: i32, %arg1: i32) -> (i32, i32) {
    %c0_i32 = arith.constant 0 : i32
    %c0_i32_0 = arith.constant 0 : i32
    return %arg1, %c0_i32 : i32, i32
  }
  func.func @transform_1(%arg0: i32, %arg1: i32) -> (i32, i32) {
    %c0_i32 = arith.constant 0 : i32
    %c0_i32_0 = arith.constant 0 : i32
    %c0_i32_1 = arith.constant 0 : i32
    return %c0_i32, %c0_i32_0 : i32, i32
  }
  func.func @transform_2(%arg0: i32, %arg1: i32) -> (i32, i32) {
    %c0_i32 = arith.constant 0 : i32
    %c0_i32_0 = arith.constant 0 : i32
    return %arg1, %c0_i32 : i32, i32
  }
  func.func @transform_3(%arg0: i32, %arg1: i32) -> (i32, i32) {
    %c0_i32 = arith.constant 0 : i32
    %c0_i32_0 = arith.constant 0 : i32
    %c0_i32_1 = arith.constant 0 : i32
    return %c0_i32, %c0_i32_0 : i32, i32
  }
  func.func @transform_4(%arg0: i32, %arg1: i32) -> (i32, i32) {
    %c0_i32 = arith.constant 0 : i32
    %c0_i32_0 = arith.constant 0 : i32
    %c0_i32_1 = arith.constant 0 : i32
    return %c0_i32, %c0_i32_0 : i32, i32
  }
  func.func @transform_5(%arg0: i32, %arg1: i32) -> (i32, i32) {
    %c0_i32 = arith.constant 0 : i32
    %c0_i32_0 = arith.constant 0 : i32
    %c0_i32_1 = arith.constant 0 : i32
    return %c0_i32, %c0_i32_0 : i32, i32
  }
  func.func @transform_6(%arg0: i32, %arg1: i32) -> (i32, i32) {
    %c0_i32 = arith.constant 0 : i32
    %c0_i32_0 = arith.constant 0 : i32
    %c0_i32_1 = arith.constant 0 : i32
    return %c0_i32, %c0_i32_0 : i32, i32
  }
}

</mosaic_0001>

<llo_original>
// kernel: tpu_custom_call.1
$region0: #{tpu_custom_call.1}
  #allocation0 [shape = 'u32[]', space=smem, size = 0x4, offset = 0x4, fixed_abs, tag = 'smem constant byte address 0x4 - core index']
  #allocation1 [shape = 'u32[72,128]{1,0:T(1,128)}', space=vmem, size = 0x9000, scoped, tag = 'internal scratch']
  #allocation2 [shape = 'bf16[128,128]{1,0:T(8,128)(2,1)}', space=vmem, size = 0x8000, scoped, tag = 'scratch operand']
  #allocation3 [shape = 'f32[1,128]{1,0:T(1,128)}', space=vmem, size = 0x200, scoped, tag = 'scratch operand']
  %s0 = inlined_call_operand.hbm [shape: bf16[128,128], index: 0, kind: input, shape index: {}]
  %s1 = inlined_call_operand.hbm [shape: bf16[128,128], index: 1, kind: input, shape index: {}]
  %s2 = inlined_call_operand.vmem [shape: f32[128,1], index: 2, kind: input, shape index: {}]
  %s3 = inlined_call_operand.vmem [shape: bf16[256,128], index: 3, kind: input, shape index: {}]
  %s4 = inlined_call_operand.hbm [shape: bf16[256,128], index: 4, kind: input, shape index: {}]
  %s5 = inlined_call_operand.vmem [shape: f32[1,128], index: 5, kind: input, shape index: {}]
  %s6 = inlined_call_operand.hbm [shape: f32[1,1], index: 6, kind: output, shape index: {}]
  %s7 = sld [smem:[#allocation0]]
  $region85: #{tpu_custom_call.1} parent=0
    _
  %s9 = ssub.s32 1, %s7
  %s10 = scalar_select 0, %s9, %s7
  $region1: #{tpu_custom_call.1} parent=0
    #allocation4 [shape = 'u8[32768]{0}', space=vmem, size = 0x8000, scoped, tag = 'input window, operand 0, single buffered']
    #allocation5 [shape = 's32[2]{0}', space=sflag, size = 0x8, scoped, tag = 'scoped memory for tpu_custom_call.1']
    #allocation6 [shape = 's32[2]{0}', space=sflag, size = 0x8, scoped, tag = 'scoped memory for tpu_custom_call.1']
    #allocation7 [shape = 'u8[32768]{0}', space=vmem, size = 0x8000, scoped, tag = 'input window, operand 1, single buffered']
    #allocation8 [shape = 's32[1]{0}', space=sflag, size = 0x4, scoped, tag = 'scoped memory for tpu_custom_call.1']
    #allocation9 [shape = 'u8[65536]{0}', space=vmem, size = 0x10000, scoped, tag = 'input window, operand 4, single buffered']
    #allocation10 [shape = 'u8[512]{0}', space=vmem, size = 0x400, scoped, tag = 'output window, operand 0, single buffered']
    %11 = vsyncpa [#allocation5], 0
    %12 = vsyncpa [#allocation8], 0
    %13 = vsyncpa [#allocation6], 0
    loop: start=0, step=1, limit=4
    $region2: #{tpu_custom_call.1} parent=1 // loop_pre_header
      _
    $region3: #{tpu_custom_call.1} parent=1 // loop_header
      %s15 = sphi 0, %s19
      %p16 = scmp.ge.s32.totalorder %s15, 4
      %s22 = sphi 0, %s34
      %s23 = sphi 0, %s30
      %s24 = sphi 0, %s22
      %s25 = sphi 0, %s23
      %s26 = sphi 0, %s24
      %s27 = sphi 0, %s25
      %s37 = sphi 0, %s39
      %s40 = sphi 0, %s37
      %s41 = sphi 0, %s40
      %s57 = sphi 0, %s41
      %s61 = sphi 0, %s61
      %s63 = sphi 0, %s61
      %s64 = sphi 0, %s63
      %s78 = sphi 0, %s64
      %s84 = sphi 0, %s86
      %s87 = sphi 0, %s84
      %s88 = sphi 0, %s87
      %s104 = sphi 0, %s88
      %s108 = sphi 0, %s108
      %s110 = sphi 0, %s108
      %s111 = sphi 0, %s110
      %s125 = sphi 0, %s111
      %s129 = sphi 0, %s129
      %s131 = sphi 0, %s129
      %s132 = sphi 0, %s131
      %s146 = sphi 0, %s132
      %s150 = sphi 0, %s150
      %s152 = sphi 0, %s150
      %s153 = sphi 0, %s152
      %s167 = sphi 0, %s153
      %s171 = sphi 0, %s171
      %s173 = sphi 0, %s171
      %s174 = sphi 0, %s173
      %s188 = sphi 0, %s174
    $region4: #{tpu_custom_call.1} parent=1 // loop_header_branch
      %18 = sbr.rel (%p16) target = $region8
    $region5: #{tpu_custom_call.1} parent=1 // loop_body
      %s20 = ssub.s32 %s15, 1
      %s21 = ssub.s32 %s15, 2
      %s28 = sadd.s32 1, %s23
      %p29 = scmp.ge.s32.totalorder %s28, 1
      %s30 = scalar_select %p29, 0, %s28
      %s31 = sadd.s32 1, %s22
      %s32 = scalar_select %p29, %s31, %s22
      %p33 = scmp.ge.s32.totalorder %s32, 2
      %s34 = scalar_select %p33, 0, %s32
      %s35 = ssub.s32 %s23, %s30
      %p36 = scmp.eq.s32.totalorder %s35, 0
      %s38 = sadd.s32 %s37, 1
      %s39 = scalar_select %p36, %s37, %s38
      %p42 = pneg %p36
      %p43 = scmp.eq.s32.totalorder %s15, 1
      %p44 = por %p42, %p43
      %p45 = scmp.ne.s32.totalorder %s37, %s40
      %p46 = scmp.eq.s32.totalorder %s15, 0
      %p47 = por %p45, %p46
      %p48 = scmp.ne.s32.totalorder %s37, %s40
      %p49 = scmp.eq.s32.totalorder %s20, 1
      %p50 = por %p48, %p49
      %p51 = scmp.ne.s32.totalorder %s40, %s41
      %p52 = scmp.eq.s32.totalorder %s20, 0
      %p53 = por %p51, %p52
      %p54 = scmp.ne.s32.totalorder %s40, %s41
      %p55 = scmp.eq.s32.totalorder %s21, 1
      %p56 = por %p54, %p55
      %p58 = scmp.ne.s32.totalorder %s41, %s57
      %p59 = scmp.eq.s32.totalorder %s21, 0
      %p60 = por %p58, %p59
      %s62 = sadd.s32 %s61, 1
      %p65 = scmp.eq.s32.totalorder %s15, 1
      %p66 = scmp.ne.s32.totalorder %s61, %s63
      %p67 = scmp.eq.s32.totalorder %s15, 0
      %p68 = por %p66, %p67
      %p69 = scmp.ne.s32.totalorder %s61, %s63
      %p70 = scmp.eq.s32.totalorder %s20, 1
      %p71 = por %p69, %p70
      %p72 = scmp.ne.s32.totalorder %s63, %s64
      %p73 = scmp.eq.s32.totalorder %s20, 0
      %p74 = por %p72, %p73
      %p75 = scmp.ne.s32.totalorder %s63, %s64
      %p76 = scmp.eq.s32.totalorder %s21, 1
      %p77 = por %p75, %p76
      %p79 = scmp.ne.s32.totalorder %s64, %s78
      %p80 = scmp.eq.s32.totalorder %s21, 0
      %p81 = por %p79, %p80
      %s82 = ssub.s32 %s23, %s30
      %p83 = scmp.eq.s32.totalorder %s82, 0
      %s85 = sadd.s32 %s84, 1
      %s86 = scalar_select %p83, %s84, %s85
      %p89 = pneg %p83
      %p90 = scmp.eq.s32.totalorder %s15, 1
      %p91 = por %p89, %p90
      %p92 = scmp.ne.s32.totalorder %s84, %s87
      %p93 = scmp.eq.s32.totalorder %s15, 0
      %p94 = por %p92, %p93
      %p95 = scmp.ne.s32.totalorder %s84, %s87
      %p96 = scmp.eq.s32.totalorder %s20, 1
      %p97 = por %p95, %p96
      %p98 = scmp.ne.s32.totalorder %s87, %s88
      %p99 = scmp.eq.s32.totalorder %s20, 0
      %p100 = por %p98, %p99
      %p101 = scmp.ne.s32.totalorder %s87, %s88
      %p102 = scmp.eq.s32.totalorder %s21, 1
      %p103 = por %p101, %p102
      %p105 = scmp.ne.s32.totalorder %s88, %s104
      %p106 = scmp.eq.s32.totalorder %s21, 0
      %p107 = por %p105, %p106
      %s109 = sadd.s32 %s108, 1
      %p112 = scmp.eq.s32.totalorder %s15, 1
      %p113 = scmp.ne.s32.totalorder %s108, %s110
      %p114 = scmp.eq.s32.totalorder %s15, 0
      %p115 = por %p113, %p114
      %p116 = scmp.ne.s32.totalorder %s108, %s110
      %p117 = scmp.eq.s32.totalorder %s20, 1
      %p118 = por %p116, %p117
      %p119 = scmp.ne.s32.totalorder %s110, %s111
      %p120 = scmp.eq.s32.totalorder %s20, 0
      %p121 = por %p119, %p120
      %p122 = scmp.ne.s32.totalorder %s110, %s111
      %p123 = scmp.eq.s32.totalorder %s21, 1
      %p124 = por %p122, %p123
      %p126 = scmp.ne.s32.totalorder %s111, %s125
      %p127 = scmp.eq.s32.totalorder %s21, 0
      %p128 = por %p126, %p127
      %s130 = sadd.s32 %s129, 1
      %p133 = scmp.eq.s32.totalorder %s15, 1
      %p134 = scmp.ne.s32.totalorder %s129, %s131
      %p135 = scmp.eq.s32.totalorder %s15, 0
      %p136 = por %p134, %p135
      %p137 = scmp.ne.s32.totalorder %s129, %s131
      %p138 = scmp.eq.s32.totalorder %s20, 1
      %p139 = por %p137, %p138
      %p140 = scmp.ne.s32.totalorder %s131, %s132
      %p141 = scmp.eq.s32.totalorder %s20, 0
      %p142 = por %p140, %p141
      %p143 = scmp.ne.s32.totalorder %s131, %s132
      %p144 = scmp.eq.s32.totalorder %s21, 1
      %p145 = por %p143, %p144
      %p147 = scmp.ne.s32.totalorder %s132, %s146
      %p148 = scmp.eq.s32.totalorder %s21, 0
      %p149 = por %p147, %p148
      %s151 = sadd.s32 %s150, 1
      %p154 = scmp.eq.s32.totalorder %s15, 1
      %p155 = scmp.ne.s32.totalorder %s150, %s152
      %p156 = scmp.eq.s32.totalorder %s15, 0
      %p157 = por %p155, %p156
      %p158 = scmp.ne.s32.totalorder %s150, %s152
      %p159 = scmp.eq.s32.totalorder %s20, 1
      %p160 = por %p158, %p159
      %p161 = scmp.ne.s32.totalorder %s152, %s153
      %p162 = scmp.eq.s32.totalorder %s20, 0
      %p163 = por %p161, %p162
      %p164 = scmp.ne.s32.totalorder %s152, %s153
      %p165 = scmp.eq.s32.totalorder %s21, 1
      %p166 = por %p164, %p165
      %p168 = scmp.ne.s32.totalorder %s153, %s167
      %p169 = scmp.eq.s32.totalorder %s21, 0
      %p170 = por %p168, %p169
      %s172 = sadd.s32 %s171, 1
      %p175 = scmp.eq.s32.totalorder %s15, 1
      %p176 = scmp.ne.s32.totalorder %s171, %s173
      %p177 = scmp.eq.s32.totalorder %s15, 0
      %p178 = por %p176, %p177
      %p179 = scmp.ne.s32.totalorder %s171, %s173
      %p180 = scmp.eq.s32.totalorder %s20, 1
      %p181 = por %p179, %p180
      %p182 = scmp.ne.s32.totalorder %s173, %s174
      %p183 = scmp.eq.s32.totalorder %s20, 0
      %p184 = por %p182, %p183
      %p185 = scmp.ne.s32.totalorder %s173, %s174
      %p186 = scmp.eq.s32.totalorder %s21, 1
      %p187 = por %p185, %p186
      %p189 = scmp.ne.s32.totalorder %s174, %s188
      %p190 = scmp.eq.s32.totalorder %s21, 0
      %p191 = por %p189, %p190
      %p192 = scmp.le.s32.totalorder 1, %s15
      %p193 = scmp.lt.s32.totalorder %s15, 3
      %p194 = pnand %p192, %p193
      %p195 = pneg %p194
      // Predicated region
      $region9: #{tpu_custom_call.1} parent=5 // pred_check
        _
      $region10: #{tpu_custom_call.1} parent=5 // pred_check_branch
        %197 = sbr.rel (%p194) target = $region12
      $region11: #{tpu_custom_call.1} parent=5 // pred_region
        %s198 = ssub.s32 %s15, 1
        // Predicated region
        $region13: #{tpu_custom_call.1} parent=11 // pred_check
          %p199 = pneg %p53
        $region14: #{tpu_custom_call.1} parent=11 // pred_check_branch
          %201 = sbr.rel (%p199) target = $region16
        $region15: #{tpu_custom_call.1} parent=11 // pred_region
          %s202 = smul.u32 16, %s25
          %204 = vsyncadd [#allocation5], 0
          %s205 = smul.addr %s202, 4
          %s206 = scalar_lea.hbm %s0, %s205
          %s207 = sshll.u32 %s206, 4
          %s208 = int_to_ptr.hbm [resolvable:$true] %s207
          %s209 = sshll.u32 [#allocation4], 4
          %s210 = int_to_ptr.vmem [resolvable:$true] %s209
          %215 = dma.hbm_to_vmem [thread:$0]  %s208, 1024, %s210, [#allocation5], 64, 64, 4
        $region16: #{tpu_custom_call.1} parent=11 // pred_fallthru
          _
        // Predicated region
        $region17: #{tpu_custom_call.1} parent=11 // pred_check
          %p216 = pneg %p74
        $region18: #{tpu_custom_call.1} parent=11 // pred_check_branch
          %218 = sbr.rel (%p216) target = $region20
        $region19: #{tpu_custom_call.1} parent=11 // pred_region
          %220 = vsyncadd [#allocation8], 0
          %s221 = sshll.u32 %s1, 4
          %s222 = int_to_ptr.hbm [resolvable:$true] %s221
          %s223 = sshll.u32 [#allocation7], 4
          %s224 = int_to_ptr.vmem [resolvable:$true] %s223
          %229 = dma.hbm_to_vmem [thread:$0]  %s222, 1024, %s224, [#allocation8], 64, 64, 4
        $region20: #{tpu_custom_call.1} parent=11 // pred_fallthru
          _
        // Predicated region
        $region21: #{tpu_custom_call.1} parent=11 // pred_check
          %p230 = pneg %p100
        $region22: #{tpu_custom_call.1} parent=11 // pred_check_branch
          %232 = sbr.rel (%p230) target = $region24
        $region23: #{tpu_custom_call.1} parent=11 // pred_region
          %s233 = smul.u32 16, %s25
          %p234 = scmp.lt.s32.totalorder %s233, 15
          %s235 = scalar_select %p234, %s233, 15
          %s236 = smul.addr %s235, 8
          %s237 = scalar_lea.vmem %s2, %s236
          %s238 = smul.u32 16, %s25
        $region24: #{tpu_custom_call.1} parent=11 // pred_fallthru
          _
        // Predicated region
        $region25: #{tpu_custom_call.1} parent=11 // pred_check
          %p239 = pneg %p121
        $region26: #{tpu_custom_call.1} parent=11 // pred_check_branch
          %241 = sbr.rel (%p239) target = $region28
        $region27: #{tpu_custom_call.1} parent=11 // pred_region
          _
        $region28: #{tpu_custom_call.1} parent=11 // pred_fallthru
          _
        // Predicated region
        $region29: #{tpu_custom_call.1} parent=11 // pred_check
          %p242 = pneg %p142
        $region30: #{tpu_custom_call.1} parent=11 // pred_check_branch
          %244 = sbr.rel (%p242) target = $region32
        $region31: #{tpu_custom_call.1} parent=11 // pred_region
          %246 = vsyncadd [#allocation8], 0
          %s247 = sshll.u32 %s4, 4
          %s248 = int_to_ptr.hbm [resolvable:$true] %s247
          %s249 = sshll.u32 [#allocation9], 4
          %s250 = int_to_ptr.vmem [resolvable:$true] %s249
          %255 = dma.hbm_to_vmem [thread:$0]  %s248, 2048, %s250, [#allocation8], 64, 64, 4
        $region32: #{tpu_custom_call.1} parent=11 // pred_fallthru
          _
        // Predicated region
        $region33: #{tpu_custom_call.1} parent=11 // pred_check
          %p256 = pneg %p163
        $region34: #{tpu_custom_call.1} parent=11 // pred_check_branch
          %258 = sbr.rel (%p256) target = $region36
        $region35: #{tpu_custom_call.1} parent=11 // pred_region
          _
        $region36: #{tpu_custom_call.1} parent=11 // pred_fallthru
          _
      $region12: #{tpu_custom_call.1} parent=5 // pred_fallthru
        _
      %p259 = scmp.lt.s32.totalorder %s15, 2
      // Predicated region
      $region37: #{tpu_custom_call.1} parent=5 // pred_check
        %p260 = pneg %p259
      $region38: #{tpu_custom_call.1} parent=5 // pred_check_branch
        %262 = sbr.rel (%p260) target = $region40
      $region39: #{tpu_custom_call.1} parent=5 // pred_region
        _
      $region40: #{tpu_custom_call.1} parent=5 // pred_fallthru
        _
      %p263 = scmp.le.s32.totalorder 1, %s15
      %p264 = scmp.lt.s32.totalorder %s15, 3
      %p265 = pnand %p263, %p264
      %p266 = pneg %p265
      // Predicated region
      $region41: #{tpu_custom_call.1} parent=5 // pred_check
        _
      $region42: #{tpu_custom_call.1} parent=5 // pred_check_branch
        %268 = sbr.rel (%p265) target = $region44
      $region43: #{tpu_custom_call.1} parent=5 // pred_region
        %s269 = ssub.s32 %s15, 1
        // Predicated region
        $region45: #{tpu_custom_call.1} parent=43 // pred_check
          %p270 = pneg %p53
        $region46: #{tpu_custom_call.1} parent=43 // pred_check_branch
          %272 = sbr.rel (%p270) target = $region48
        $region47: #{tpu_custom_call.1} parent=43 // pred_region
          %274 = dma.done [#allocation5], 1024
        $region48: #{tpu_custom_call.1} parent=43 // pred_fallthru
          _
        // Predicated region
        $region49: #{tpu_custom_call.1} parent=43 // pred_check
          %p275 = pneg %p74
        $region50: #{tpu_custom_call.1} parent=43 // pred_check_branch
          %277 = sbr.rel (%p275) target = $region52
        $region51: #{tpu_custom_call.1} parent=43 // pred_region
          %279 = dma.done [#allocation8], 1024
        $region52: #{tpu_custom_call.1} parent=43 // pred_fallthru
          _
        // Predicated region
        $region53: #{tpu_custom_call.1} parent=43 // pred_check
          %p280 = pneg %p142
        $region54: #{tpu_custom_call.1} parent=43 // pred_check_branch
          %282 = sbr.rel (%p280) target = $region56
        $region55: #{tpu_custom_call.1} parent=43 // pred_region
          %284 = dma.done [#allocation8], 2048
        $region56: #{tpu_custom_call.1} parent=43 // pred_fallthru
          _
        %p285 = pneg %p53
        %p286 = pneg %p50
        %p287 = pneg %p74
        %p288 = pneg %p71
        %s289 = smul.u32 16, %s25
        %p290 = scmp.lt.s32.totalorder %s289, 15
        %s291 = scalar_select %p290, %s289, 15
        %s292 = smul.addr %s291, 8
        %s293 = scalar_lea.vmem %s2, %s292
        %p294 = pneg %p100
        %p295 = pneg %p97
        %p296 = pneg %p121
        %p297 = pneg %p118
        %p298 = pneg %p142
        %p299 = pneg %p139
        %p300 = pneg %p163
        %p301 = pneg %p160
        %p302 = pneg %p184
        %p303 = pneg %p181
        %s304 = smul.u32 16, %s25
        %s305 = smul.u32 16, %s25
        %p306 = scmp.lt.s32.totalorder %s305, 15
        %s307 = scalar_select %p306, %s305, 15
        %s308 = smul.addr %s307, 8
        %s309 = scalar_lea.vmem %s2, %s308
        %s310 = smul.u32 16, %s25
        %s311 = smul.u32 %s25, 128
        %v312 = vld [vmem:[#allocation4] sm:$0xf]
        %v313 = vld [vmem:[#allocation4 + $0x4] sm:$0xf]
        %v314 = vld [vmem:[#allocation4 + $0x8] sm:$0xf]
        %v315 = vld [vmem:[#allocation4 + $0xc] sm:$0xf]
        %v316 = vld [vmem:[#allocation4 + $0x10] sm:$0xf]
        %v317 = vld [vmem:[#allocation4 + $0x14] sm:$0xf]
        %v318 = vld [vmem:[#allocation4 + $0x18] sm:$0xf]
        %v319 = vld [vmem:[#allocation4 + $0x1c] sm:$0xf]
        %v320 = vld [vmem:[#allocation4 + $0x20] sm:$0xf]
        %v321 = vld [vmem:[#allocation4 + $0x24] sm:$0xf]
        %v322 = vld [vmem:[#allocation4 + $0x28] sm:$0xf]
        %v323 = vld [vmem:[#allocation4 + $0x2c] sm:$0xf]
        %v324 = vld [vmem:[#allocation4 + $0x30] sm:$0xf]
        %v325 = vld [vmem:[#allocation4 + $0x34] sm:$0xf]
        %v326 = vld [vmem:[#allocation4 + $0x38] sm:$0xf]
        %v327 = vld [vmem:[#allocation4 + $0x3c] sm:$0xf]
        %v328 = vld [vmem:[%s309] sm:$0xff]
        %v329 = vld [vmem:[%s309 + $0x8] sm:$0xff]
        %v330 = vld [vmem:[%s309 + $0x10] sm:$0xff]
        %v331 = vld [vmem:[%s309 + $0x18] sm:$0xff]
        %v332 = vld [vmem:[%s309 + $0x20] sm:$0xff]
        %v333 = vld [vmem:[%s309 + $0x28] sm:$0xff]
        %v334 = vld [vmem:[%s309 + $0x30] sm:$0xff]
        %v335 = vld [vmem:[%s309 + $0x38] sm:$0xff]
        %v336 = vld [vmem:[%s309 + $0x40] sm:$0xff]
        %v337 = vld [vmem:[%s309 + $0x48] sm:$0xff]
        %v338 = vld [vmem:[%s309 + $0x50] sm:$0xff]
        %v339 = vld [vmem:[%s309 + $0x58] sm:$0xff]
        %v340 = vld [vmem:[%s309 + $0x60] sm:$0xff]
        %v341 = vld [vmem:[%s309 + $0x68] sm:$0xff]
        %v342 = vld [vmem:[%s309 + $0x70] sm:$0xff]
        %v343 = vld [vmem:[%s309 + $0x78] sm:$0xff]
        %p344 = scmp.eq.s32.totalorder %s24, 0
        // Predicated region
        $region57: #{tpu_custom_call.1} parent=43 // pred_check
          %p345 = pneg %p344
        $region58: #{tpu_custom_call.1} parent=43 // pred_check_branch
          %347 = sbr.rel (%p345) target = $region60
        $region59: #{tpu_custom_call.1} parent=43 // pred_region
          %v348 = vld [vmem:[#allocation7] sm:$0xf]
          %v349 = vld [vmem:[#allocation7 + $0x4] sm:$0xf]
          %v350 = vld [vmem:[#allocation7 + $0x8] sm:$0xf]
          %v351 = vld [vmem:[#allocation7 + $0xc] sm:$0xf]
          %v352 = vld [vmem:[#allocation7 + $0x10] sm:$0xf]
          %v353 = vld [vmem:[#allocation7 + $0x14] sm:$0xf]
          %v354 = vld [vmem:[#allocation7 + $0x18] sm:$0xf]
          %v355 = vld [vmem:[#allocation7 + $0x1c] sm:$0xf]
          %v356 = vld [vmem:[#allocation7 + $0x20] sm:$0xf]
          %v357 = vld [vmem:[#allocation7 + $0x24] sm:$0xf]
          %v358 = vld [vmem:[#allocation7 + $0x28] sm:$0xf]
          %v359 = vld [vmem:[#allocation7 + $0x2c] sm:$0xf]
          %v360 = vld [vmem:[#allocation7 + $0x30] sm:$0xf]
          %v361 = vld [vmem:[#allocation7 + $0x34] sm:$0xf]
          %v362 = vld [vmem:[#allocation7 + $0x38] sm:$0xf]
          %v363 = vld [vmem:[#allocation7 + $0x3c] sm:$0xf]
          %v380 = vunpack.c.l.b16 %v312
          %v381 = vunpack.c.l.b16 %v313
          %v382 = vunpack.c.l.b16 %v314
          %v383 = vunpack.c.l.b16 %v315
          %v384 = vunpack.c.l.b16 %v316
          %v385 = vunpack.c.l.b16 %v317
          %v386 = vunpack.c.l.b16 %v318
          %v387 = vunpack.c.l.b16 %v319
          %v388 = vunpack.c.l.b16 %v320
          %v389 = vunpack.c.l.b16 %v321
          %v390 = vunpack.c.l.b16 %v322
          %v391 = vunpack.c.l.b16 %v323
          %v392 = vunpack.c.l.b16 %v324
          %v393 = vunpack.c.l.b16 %v325
          %v394 = vunpack.c.l.b16 %v326
          %v395 = vunpack.c.l.b16 %v327
          %v396 = vpack.c.b16 %v381, %v380
          %v397 = vpack.c.b16 %v383, %v382
          %v398 = vpack.c.b16 %v385, %v384
          %v399 = vpack.c.b16 %v387, %v386
          %v400 = vpack.c.b16 %v389, %v388
          %v401 = vpack.c.b16 %v391, %v390
          %v402 = vpack.c.b16 %v393, %v392
          %v403 = vpack.c.b16 %v395, %v394
          %v428 = vunpack.c.l.b16 %v348
          %v429 = vunpack.c.l.b16 %v349
          %v430 = vunpack.c.l.b16 %v350
          %v431 = vunpack.c.l.b16 %v351
          %v432 = vunpack.c.l.b16 %v352
          %v433 = vunpack.c.l.b16 %v353
          %v434 = vunpack.c.l.b16 %v354
          %v435 = vunpack.c.l.b16 %v355
          %v436 = vunpack.c.l.b16 %v356
          %v437 = vunpack.c.l.b16 %v357
          %v438 = vunpack.c.l.b16 %v358
          %v439 = vunpack.c.l.b16 %v359
          %v440 = vunpack.c.l.b16 %v360
          %v441 = vunpack.c.l.b16 %v361
          %v442 = vunpack.c.l.b16 %v362
          %v443 = vunpack.c.l.b16 %v363
          %v444 = vpack.c.b16 %v429, %v428
          %v445 = vpack.c.b16 %v431, %v430
          %v446 = vpack.c.b16 %v433, %v432
          %v447 = vpack.c.b16 %v435, %v434
          %v448 = vpack.c.b16 %v437, %v436
          %v449 = vpack.c.b16 %v439, %v438
          %v450 = vpack.c.b16 %v441, %v440
          %v451 = vpack.c.b16 %v443, %v442
          %460 = vmatpush.bf16.msra.mxu0 %v451
          %461 = vmatpush.bf16.msra.mxu0 %v450
          %462 = vmatpush.bf16.msra.mxu0 %v449
          %463 = vmatpush.bf16.msra.mxu0 %v448
          %464 = vmatpush.bf16.msra.mxu0 %v447
          %465 = vmatpush.bf16.msra.mxu0 %v446
          %466 = vmatpush.bf16.msra.mxu0 %v445
          %467 = vmatpush.bf16.msra.mxu0 %v444
          %468 = vmatmul.bf16.gmra.mxu0 %v396
          %v469 = vpop.f32.mrf.mxu0
          %v470 = vadd.f32 0.0, %v469
          %v471 = vpop.f32.mrf.mxu0
          %v472 = vadd.f32 0.0, %v471
          %473 = vmatmul.bf16.gmra.mxu0 %v397
          %v474 = vpop.f32.mrf.mxu0
          %v475 = vadd.f32 0.0, %v474
          %v476 = vpop.f32.mrf.mxu0
          %v477 = vadd.f32 0.0, %v476
          %478 = vmatmul.bf16.gmra.mxu0 %v398
          %v479 = vpop.f32.mrf.mxu0
          %v480 = vadd.f32 0.0, %v479
          %v481 = vpop.f32.mrf.mxu0
          %v482 = vadd.f32 0.0, %v481
          %483 = vmatmul.bf16.gmra.mxu0 %v399
          %v484 = vpop.f32.mrf.mxu0
          %v485 = vadd.f32 0.0, %v484
          %v486 = vpop.f32.mrf.mxu0
          %v487 = vadd.f32 0.0, %v486
          %488 = vmatmul.bf16.gmra.mxu0 %v400
          %v489 = vpop.f32.mrf.mxu0
          %v490 = vadd.f32 0.0, %v489
          %v491 = vpop.f32.mrf.mxu0
          %v492 = vadd.f32 0.0, %v491
          %493 = vmatmul.bf16.gmra.mxu0 %v401
          %v494 = vpop.f32.mrf.mxu0
          %v495 = vadd.f32 0.0, %v494
          %v496 = vpop.f32.mrf.mxu0
          %v497 = vadd.f32 0.0, %v496
          %498 = vmatmul.bf16.gmra.mxu0 %v402
          %v499 = vpop.f32.mrf.mxu0
          %v500 = vadd.f32 0.0, %v499
          %v501 = vpop.f32.mrf.mxu0
          %v502 = vadd.f32 0.0, %v501
          %503 = vmatmul.bf16.gmra.mxu0 %v403
          %v504 = vpop.f32.mrf.mxu0
          %v505 = vadd.f32 0.0, %v504
          %v506 = vpop.f32.mrf.mxu0
          %v507 = vadd.f32 0.0, %v506
          %508 = vdwg.mxu0
          %510 = vset.pattern.permute.xlu0 0
          %511 = vperm.xlu0 %510, %v328
          %v512 = vpop.permute.xlu0 %511
          %515 = vset.pattern.permute.xlu0 0
          %516 = vperm.xlu0 %515, %v329
          %v517 = vpop.permute.xlu0 %516
          %520 = vset.pattern.permute.xlu0 0
          %521 = vperm.xlu0 %520, %v330
          %v522 = vpop.permute.xlu0 %521
          %525 = vset.pattern.permute.xlu0 0
          %526 = vperm.xlu0 %525, %v331
          %v527 = vpop.permute.xlu0 %526
          %530 = vset.pattern.permute.xlu0 0
          %531 = vperm.xlu0 %530, %v332
          %v532 = vpop.permute.xlu0 %531
          %535 = vset.pattern.permute.xlu0 0
          %536 = vperm.xlu0 %535, %v333
          %v537 = vpop.permute.xlu0 %536
          %540 = vset.pattern.permute.xlu0 0
          %541 = vperm.xlu0 %540, %v334
          %v542 = vpop.permute.xlu0 %541
          %545 = vset.pattern.permute.xlu0 0
          %546 = vperm.xlu0 %545, %v335
          %v547 = vpop.permute.xlu0 %546
          %550 = vset.pattern.permute.xlu0 0
          %551 = vperm.xlu0 %550, %v336
          %v552 = vpop.permute.xlu0 %551
          %555 = vset.pattern.permute.xlu0 0
          %556 = vperm.xlu0 %555, %v337
          %v557 = vpop.permute.xlu0 %556
          %560 = vset.pattern.permute.xlu0 0
          %561 = vperm.xlu0 %560, %v338
          %v562 = vpop.permute.xlu0 %561
          %565 = vset.pattern.permute.xlu0 0
          %566 = vperm.xlu0 %565, %v339
          %v567 = vpop.permute.xlu0 %566
          %570 = vset.pattern.permute.xlu0 0
          %571 = vperm.xlu0 %570, %v340
          %v572 = vpop.permute.xlu0 %571
          %575 = vset.pattern.permute.xlu0 0
          %576 = vperm.xlu0 %575, %v341
          %v577 = vpop.permute.xlu0 %576
          %580 = vset.pattern.permute.xlu0 0
          %581 = vperm.xlu0 %580, %v342
          %v582 = vpop.permute.xlu0 %581
          %585 = vset.pattern.permute.xlu0 0
          %586 = vperm.xlu0 %585, %v343
          %v587 = vpop.permute.xlu0 %586
          %v589 = vmul.f32 %v470, %v512
          %v590 = vmul.f32 %v472, %v517
          %v591 = vmul.f32 %v475, %v522
          %v592 = vmul.f32 %v477, %v527
          %v593 = vmul.f32 %v480, %v532
          %v594 = vmul.f32 %v482, %v537
          %v595 = vmul.f32 %v485, %v542
          %v596 = vmul.f32 %v487, %v547
          %v597 = vmul.f32 %v490, %v552
          %v598 = vmul.f32 %v492, %v557
          %v599 = vmul.f32 %v495, %v562
          %v600 = vmul.f32 %v497, %v567
          %v601 = vmul.f32 %v500, %v572
          %v602 = vmul.f32 %v502, %v577
          %v603 = vmul.f32 %v505, %v582
          %v604 = vmul.f32 %v507, %v587
          %s605 = sshra.s32 %s311, 3
          %s606 = sand.u32 %s311, 7
          %s607 = smul.addr %s605, 4
          %s608 = scalar_lea.vmem [#allocation7], %s607
          %v609 = vld [vmem:[%s608] sm:$0xf]
          %v610 = vld [vmem:[%s608 + $0x4] sm:$0xf]
          %v611 = vld [vmem:[%s608 + $0x8] sm:$0xf]
          %v612 = vld [vmem:[%s608 + $0xc] sm:$0xf]
          %v613 = vld [vmem:[%s608 + $0x10] sm:$0xf]
          %v614 = vld [vmem:[%s608 + $0x14] sm:$0xf]
          %v615 = vld [vmem:[%s608 + $0x18] sm:$0xf]
          %v616 = vld [vmem:[%s608 + $0x1c] sm:$0xf]
          %v617 = vld [vmem:[%s608 + $0x20] sm:$0xf]
          %v618 = vld [vmem:[%s608 + $0x24] sm:$0xf]
          %v619 = vld [vmem:[%s608 + $0x28] sm:$0xf]
          %v620 = vld [vmem:[%s608 + $0x2c] sm:$0xf]
          %v621 = vld [vmem:[%s608 + $0x30] sm:$0xf]
          %v622 = vld [vmem:[%s608 + $0x34] sm:$0xf]
          %v623 = vld [vmem:[%s608 + $0x38] sm:$0xf]
          %v624 = vld [vmem:[%s608 + $0x3c] sm:$0xf]
          %v625 = vpack.c.bf16 %v589, %v589
          %v626 = vpack.c.bf16 %v590, %v590
          %v627 = vpack.c.bf16 %v591, %v591
          %v628 = vpack.c.bf16 %v592, %v592
          %v629 = vpack.c.bf16 %v593, %v593
          %v630 = vpack.c.bf16 %v594, %v594
          %v631 = vpack.c.bf16 %v595, %v595
          %v632 = vpack.c.bf16 %v596, %v596
          %v633 = vpack.c.bf16 %v597, %v597
          %v634 = vpack.c.bf16 %v598, %v598
          %v635 = vpack.c.bf16 %v599, %v599
          %v636 = vpack.c.bf16 %v600, %v600
          %v637 = vpack.c.bf16 %v601, %v601
          %v638 = vpack.c.bf16 %v602, %v602
          %v639 = vpack.c.bf16 %v603, %v603
          %v640 = vpack.c.bf16 %v604, %v604
          %v657 = vunpack.c.l.b16 %v609
          %v658 = vunpack.c.l.b16 %v610
          %v659 = vunpack.c.l.b16 %v611
          %v660 = vunpack.c.l.b16 %v612
          %v661 = vunpack.c.l.b16 %v613
          %v662 = vunpack.c.l.b16 %v614
          %v663 = vunpack.c.l.b16 %v615
          %v664 = vunpack.c.l.b16 %v616
          %v665 = vunpack.c.l.b16 %v617
          %v666 = vunpack.c.l.b16 %v618
          %v667 = vunpack.c.l.b16 %v619
          %v668 = vunpack.c.l.b16 %v620
          %v669 = vunpack.c.l.b16 %v621
          %v670 = vunpack.c.l.b16 %v622
          %v671 = vunpack.c.l.b16 %v623
          %v672 = vunpack.c.l.b16 %v624
          %v673 = vpack.c.b16 %v658, %v657
          %v674 = vpack.c.b16 %v660, %v659
          %v675 = vpack.c.b16 %v662, %v661
          %v676 = vpack.c.b16 %v664, %v663
          %v677 = vpack.c.b16 %v666, %v665
          %v678 = vpack.c.b16 %v668, %v667
          %v679 = vpack.c.b16 %v670, %v669
          %v680 = vpack.c.b16 %v672, %v671
          %v705 = vunpack.c.l.b16 %v625
          %v706 = vunpack.c.l.b16 %v626
          %v707 = vunpack.c.l.b16 %v627
          %v708 = vunpack.c.l.b16 %v628
          %v709 = vunpack.c.l.b16 %v629
          %v710 = vunpack.c.l.b16 %v630
          %v711 = vunpack.c.l.b16 %v631
          %v712 = vunpack.c.l.b16 %v632
          %v713 = vunpack.c.l.b16 %v633
          %v714 = vunpack.c.l.b16 %v634
          %v715 = vunpack.c.l.b16 %v635
          %v716 = vunpack.c.l.b16 %v636
          %v717 = vunpack.c.l.b16 %v637
          %v718 = vunpack.c.l.b16 %v638
          %v719 = vunpack.c.l.b16 %v639
          %v720 = vunpack.c.l.b16 %v640
          %v721 = vpack.c.b16 %v706, %v705
          %v722 = vpack.c.b16 %v708, %v707
          %v723 = vpack.c.b16 %v710, %v709
          %v724 = vpack.c.b16 %v712, %v711
          %v725 = vpack.c.b16 %v714, %v713
          %v726 = vpack.c.b16 %v716, %v715
          %v727 = vpack.c.b16 %v718, %v717
          %v728 = vpack.c.b16 %v720, %v719
          %v737 = vld [vmem:[%s3] sm:$0xf]
          %v738 = vld [vmem:[%s3 + $0x4] sm:$0xf]
          %v739 = vld [vmem:[%s3 + $0x8] sm:$0xf]
          %v740 = vld [vmem:[%s3 + $0xc] sm:$0xf]
          %v741 = vld [vmem:[%s3 + $0x10] sm:$0xf]
          %v742 = vld [vmem:[%s3 + $0x14] sm:$0xf]
          %v743 = vld [vmem:[%s3 + $0x18] sm:$0xf]
          %v744 = vld [vmem:[%s3 + $0x1c] sm:$0xf]
          %v745 = vld [vmem:[%s3 + $0x20] sm:$0xf]
          %v746 = vld [vmem:[%s3 + $0x24] sm:$0xf]
          %v747 = vld [vmem:[%s3 + $0x28] sm:$0xf]
          %v748 = vld [vmem:[%s3 + $0x2c] sm:$0xf]
          %v749 = vld [vmem:[%s3 + $0x30] sm:$0xf]
          %v750 = vld [vmem:[%s3 + $0x34] sm:$0xf]
          %v751 = vld [vmem:[%s3 + $0x38] sm:$0xf]
          %v752 = vld [vmem:[%s3 + $0x3c] sm:$0xf]
          %v753 = vld [vmem:[%s3 + $0x40] sm:$0xf]
          %v754 = vld [vmem:[%s3 + $0x44] sm:$0xf]
          %v755 = vld [vmem:[%s3 + $0x48] sm:$0xf]
          %v756 = vld [vmem:[%s3 + $0x4c] sm:$0xf]
          %v757 = vld [vmem:[%s3 + $0x50] sm:$0xf]
          %v758 = vld [vmem:[%s3 + $0x54] sm:$0xf]
          %v759 = vld [vmem:[%s3 + $0x58] sm:$0xf]
          %v760 = vld [vmem:[%s3 + $0x5c] sm:$0xf]
          %v761 = vld [vmem:[%s3 + $0x60] sm:$0xf]
          %v762 = vld [vmem:[%s3 + $0x64] sm:$0xf]
          %v763 = vld [vmem:[%s3 + $0x68] sm:$0xf]
          %v764 = vld [vmem:[%s3 + $0x6c] sm:$0xf]
          %v765 = vld [vmem:[%s3 + $0x70] sm:$0xf]
          %v766 = vld [vmem:[%s3 + $0x74] sm:$0xf]
          %v767 = vld [vmem:[%s3 + $0x78] sm:$0xf]
          %v768 = vld [vmem:[%s3 + $0x7c] sm:$0xf]
          %v801 = vunpack.c.l.b16 %v737
          %v802 = vunpack.c.l.b16 %v738
          %v803 = vunpack.c.l.b16 %v739
          %v804 = vunpack.c.l.b16 %v740
          %v805 = vunpack.c.l.b16 %v741
          %v806 = vunpack.c.l.b16 %v742
          %v807 = vunpack.c.l.b16 %v743
          %v808 = vunpack.c.l.b16 %v744
          %v809 = vunpack.c.l.b16 %v745
          %v810 = vunpack.c.l.b16 %v746
          %v811 = vunpack.c.l.b16 %v747
          %v812 = vunpack.c.l.b16 %v748
          %v813 = vunpack.c.l.b16 %v749
          %v814 = vunpack.c.l.b16 %v750
          %v815 = vunpack.c.l.b16 %v751
          %v816 = vunpack.c.l.b16 %v752
          %v817 = vunpack.c.l.b16 %v753
          %v818 = vunpack.c.l.b16 %v754
          %v819 = vunpack.c.l.b16 %v755
          %v820 = vunpack.c.l.b16 %v756
          %v821 = vunpack.c.l.b16 %v757
          %v822 = vunpack.c.l.b16 %v758
          %v823 = vunpack.c.l.b16 %v759
          %v824 = vunpack.c.l.b16 %v760
          %v825 = vunpack.c.l.b16 %v761
          %v826 = vunpack.c.l.b16 %v762
          %v827 = vunpack.c.l.b16 %v763
          %v828 = vunpack.c.l.b16 %v764
          %v829 = vunpack.c.l.b16 %v765
          %v830 = vunpack.c.l.b16 %v766
          %v831 = vunpack.c.l.b16 %v767
          %v832 = vunpack.c.l.b16 %v768
          %v833 = vpack.c.b16 %v802, %v801
          %v834 = vpack.c.b16 %v804, %v803
          %v835 = vpack.c.b16 %v806, %v805
          %v836 = vpack.c.b16 %v808, %v807
          %v837 = vpack.c.b16 %v810, %v809
          %v838 = vpack.c.b16 %v812, %v811
          %v839 = vpack.c.b16 %v814, %v813
          %v840 = vpack.c.b16 %v816, %v815
          %v841 = vpack.c.b16 %v818, %v817
          %v842 = vpack.c.b16 %v820, %v819
          %v843 = vpack.c.b16 %v822, %v821
          %v844 = vpack.c.b16 %v824, %v823
          %v845 = vpack.c.b16 %v826, %v825
          %v846 = vpack.c.b16 %v828, %v827
          %v847 = vpack.c.b16 %v830, %v829
          %v848 = vpack.c.b16 %v832, %v831
          %865 = vmatpush.bf16.msra.mxu0 %v840
          %866 = vmatpush.bf16.msra.mxu0 %v839
          %867 = vmatpush.bf16.msra.mxu0 %v838
          %868 = vmatpush.bf16.msra.mxu0 %v837
          %869 = vmatpush.bf16.msra.mxu0 %v836
          %870 = vmatpush.bf16.msra.mxu0 %v835
          %871 = vmatpush.bf16.msra.mxu0 %v834
          %872 = vmatpush.bf16.msra.mxu0 %v833
          %873 = vmatmul.bf16.gmra.mxu0 %v673
          %v874 = vpop.f32.mrf.mxu0
          %v875 = vadd.f32 0.0, %v874
          %v876 = vpop.f32.mrf.mxu0
          %v877 = vadd.f32 0.0, %v876
          %878 = vmatmul.bf16.gmra.mxu0 %v674
          %v879 = vpop.f32.mrf.mxu0
          %v880 = vadd.f32 0.0, %v879
          %v881 = vpop.f32.mrf.mxu0
          %v882 = vadd.f32 0.0, %v881
          %883 = vmatmul.bf16.gmra.mxu0 %v675
          %v884 = vpop.f32.mrf.mxu0
          %v885 = vadd.f32 0.0, %v884
          %v886 = vpop.f32.mrf.mxu0
          %v887 = vadd.f32 0.0, %v886
          %888 = vmatmul.bf16.gmra.mxu0 %v676
          %v889 = vpop.f32.mrf.mxu0
          %v890 = vadd.f32 0.0, %v889
          %v891 = vpop.f32.mrf.mxu0
          %v892 = vadd.f32 0.0, %v891
          %893 = vmatmul.bf16.gmra.mxu0 %v677
          %v894 = vpop.f32.mrf.mxu0
          %v895 = vadd.f32 0.0, %v894
          %v896 = vpop.f32.mrf.mxu0
          %v897 = vadd.f32 0.0, %v896
          %898 = vmatmul.bf16.gmra.mxu0 %v678
          %v899 = vpop.f32.mrf.mxu0
          %v900 = vadd.f32 0.0, %v899
          %v901 = vpop.f32.mrf.mxu0
          %v902 = vadd.f32 0.0, %v901
          %903 = vmatmul.bf16.gmra.mxu0 %v679
          %v904 = vpop.f32.mrf.mxu0
          %v905 = vadd.f32 0.0, %v904
          %v906 = vpop.f32.mrf.mxu0
          %v907 = vadd.f32 0.0, %v906
          %908 = vmatmul.bf16.gmra.mxu0 %v680
          %v909 = vpop.f32.mrf.mxu0
          %v910 = vadd.f32 0.0, %v909
          %v911 = vpop.f32.mrf.mxu0
          %v912 = vadd.f32 0.0, %v911
          %913 = vdwg.mxu0
          %914 = vmatpush.bf16.msra.mxu0 %v848
          %915 = vmatpush.bf16.msra.mxu0 %v847
          %916 = vmatpush.bf16.msra.mxu0 %v846
          %917 = vmatpush.bf16.msra.mxu0 %v845
          %918 = vmatpush.bf16.msra.mxu0 %v844
          %919 = vmatpush.bf16.msra.mxu0 %v843
          %920 = vmatpush.bf16.msra.mxu0 %v842
          %921 = vmatpush.bf16.msra.mxu0 %v841
          %922 = vmatmul.bf16.gmra.mxu0 %v721
          %v923 = vpop.f32.mrf.mxu0
          %v924 = vadd.f32 %v875, %v923
          %v925 = vpop.f32.mrf.mxu0
          %v926 = vadd.f32 %v877, %v925
          %927 = vmatmul.bf16.gmra.mxu0 %v722
          %v928 = vpop.f32.mrf.mxu0
          %v929 = vadd.f32 %v880, %v928
          %v930 = vpop.f32.mrf.mxu0
          %v931 = vadd.f32 %v882, %v930
          %932 = vmatmul.bf16.gmra.mxu0 %v723
          %v933 = vpop.f32.mrf.mxu0
          %v934 = vadd.f32 %v885, %v933
          %v935 = vpop.f32.mrf.mxu0
          %v936 = vadd.f32 %v887, %v935
          %937 = vmatmul.bf16.gmra.mxu0 %v724
          %v938 = vpop.f32.mrf.mxu0
          %v939 = vadd.f32 %v890, %v938
          %v940 = vpop.f32.mrf.mxu0
          %v941 = vadd.f32 %v892, %v940
          %942 = vmatmul.bf16.gmra.mxu0 %v725
          %v943 = vpop.f32.mrf.mxu0
          %v944 = vadd.f32 %v895, %v943
          %v945 = vpop.f32.mrf.mxu0
          %v946 = vadd.f32 %v897, %v945
          %947 = vmatmul.bf16.gmra.mxu0 %v726
          %v948 = vpop.f32.mrf.mxu0
          %v949 = vadd.f32 %v900, %v948
          %v950 = vpop.f32.mrf.mxu0
          %v951 = vadd.f32 %v902, %v950
          %952 = vmatmul.bf16.gmra.mxu0 %v727
          %v953 = vpop.f32.mrf.mxu0
          %v954 = vadd.f32 %v905, %v953
          %v955 = vpop.f32.mrf.mxu0
          %v956 = vadd.f32 %v907, %v955
          %957 = vmatmul.bf16.gmra.mxu0 %v728
          %v958 = vpop.f32.mrf.mxu0
          %v959 = vadd.f32 %v910, %v958
          %v960 = vpop.f32.mrf.mxu0
          %v961 = vadd.f32 %v912, %v960
          %962 = vdwg.mxu0
          %v963 = vmax.f32 %v924, 0.0
          %v964 = vmax.f32 %v926, 0.0
          %v965 = vmax.f32 %v929, 0.0
          %v966 = vmax.f32 %v931, 0.0
          %v967 = vmax.f32 %v934, 0.0
          %v968 = vmax.f32 %v936, 0.0
          %v969 = vmax.f32 %v939, 0.0
          %v970 = vmax.f32 %v941, 0.0
          %v971 = vmax.f32 %v944, 0.0
          %v972 = vmax.f32 %v946, 0.0
          %v973 = vmax.f32 %v949, 0.0
          %v974 = vmax.f32 %v951, 0.0
          %v975 = vmax.f32 %v954, 0.0
          %v976 = vmax.f32 %v956, 0.0
          %v977 = vmax.f32 %v959, 0.0
          %v978 = vmax.f32 %v961, 0.0
          %v979 = vpack.c.bf16 %v963, %v963
          %v980 = vpack.c.bf16 %v964, %v964
          %v981 = vpack.c.bf16 %v965, %v965
          %v982 = vpack.c.bf16 %v966, %v966
          %v983 = vpack.c.bf16 %v967, %v967
          %v984 = vpack.c.bf16 %v968, %v968
          %v985 = vpack.c.bf16 %v969, %v969
          %v986 = vpack.c.bf16 %v970, %v970
          %v987 = vpack.c.bf16 %v971, %v971
          %v988 = vpack.c.bf16 %v972, %v972
          %v989 = vpack.c.bf16 %v973, %v973
          %v990 = vpack.c.bf16 %v974, %v974
          %v991 = vpack.c.bf16 %v975, %v975
          %v992 = vpack.c.bf16 %v976, %v976
          %v993 = vpack.c.bf16 %v977, %v977
          %v994 = vpack.c.bf16 %v978, %v978
          %s995 = smul.addr %s605, 4
          %s996 = scalar_lea.vmem [#allocation2], %s995
          %997 = vst [vmem:[%s996] sm:$0xf] %v979
          %998 = vst [vmem:[%s996 + $0x4] sm:$0xf] %v980
          %999 = vst [vmem:[%s996 + $0x8] sm:$0xf] %v981
          %1000 = vst [vmem:[%s996 + $0xc] sm:$0xf] %v982
          %1001 = vst [vmem:[%s996 + $0x10] sm:$0xf] %v983
          %1002 = vst [vmem:[%s996 + $0x14] sm:$0xf] %v984
          %1003 = vst [vmem:[%s996 + $0x18] sm:$0xf] %v985
          %1004 = vst [vmem:[%s996 + $0x1c] sm:$0xf] %v986
          %1005 = vst [vmem:[%s996 + $0x20] sm:$0xf] %v987
          %1006 = vst [vmem:[%s996 + $0x24] sm:$0xf] %v988
          %1007 = vst [vmem:[%s996 + $0x28] sm:$0xf] %v989
          %1008 = vst [vmem:[%s996 + $0x2c] sm:$0xf] %v990
          %1009 = vst [vmem:[%s996 + $0x30] sm:$0xf] %v991
          %1010 = vst [vmem:[%s996 + $0x34] sm:$0xf] %v992
          %1011 = vst [vmem:[%s996 + $0x38] sm:$0xf] %v993
          %1012 = vst [vmem:[%s996 + $0x3c] sm:$0xf] %v994
        $region60: #{tpu_custom_call.1} parent=43 // pred_fallthru
          _
        %p1013 = scmp.eq.s32.totalorder %s24, 1
        // Predicated region
        $region61: #{tpu_custom_call.1} parent=43 // pred_check
          %p1014 = pneg %p1013
        $region62: #{tpu_custom_call.1} parent=43 // pred_check_branch
          %1016 = sbr.rel (%p1014) target = $region64
        $region63: #{tpu_custom_call.1} parent=43 // pred_region
          %p1017 = scmp.eq.s32.totalorder %s25, 0
          // Predicated region
          $region65: #{tpu_custom_call.1} parent=63 // pred_check
            %p1018 = pneg %p1017
          $region66: #{tpu_custom_call.1} parent=63 // pred_check_branch
            %1020 = sbr.rel (%p1018) target = $region68
          $region67: #{tpu_custom_call.1} parent=63 // pred_region
            %1021 = vst [vmem:[#allocation3] sm:$0x1] 0.0
          $region68: #{tpu_custom_call.1} parent=63 // pred_fallthru
            _
          %v1022 = vld [vmem:[#allocation2] sm:$0xf]
          %v1023 = vld [vmem:[#allocation2 + $0x4] sm:$0xf]
          %v1024 = vld [vmem:[#allocation2 + $0x8] sm:$0xf]
          %v1025 = vld [vmem:[#allocation2 + $0xc] sm:$0xf]
          %v1026 = vld [vmem:[#allocation2 + $0x10] sm:$0xf]
          %v1027 = vld [vmem:[#allocation2 + $0x14] sm:$0xf]
          %v1028 = vld [vmem:[#allocation2 + $0x18] sm:$0xf]
          %v1029 = vld [vmem:[#allocation2 + $0x1c] sm:$0xf]
          %v1030 = vld [vmem:[#allocation2 + $0x20] sm:$0xf]
          %v1031 = vld [vmem:[#allocation2 + $0x24] sm:$0xf]
          %v1032 = vld [vmem:[#allocation2 + $0x28] sm:$0xf]
          %v1033 = vld [vmem:[#allocation2 + $0x2c] sm:$0xf]
          %v1034 = vld [vmem:[#allocation2 + $0x30] sm:$0xf]
          %v1035 = vld [vmem:[#allocation2 + $0x34] sm:$0xf]
          %v1036 = vld [vmem:[#allocation2 + $0x38] sm:$0xf]
          %v1037 = vld [vmem:[#allocation2 + $0x3c] sm:$0xf]
          %v1054 = vunpack.c.l.b16 %v312
          %v1055 = vunpack.c.l.b16 %v313
          %v1056 = vunpack.c.l.b16 %v314
          %v1057 = vunpack.c.l.b16 %v315
          %v1058 = vunpack.c.l.b16 %v316
          %v1059 = vunpack.c.l.b16 %v317
          %v1060 = vunpack.c.l.b16 %v318
          %v1061 = vunpack.c.l.b16 %v319
          %v1062 = vunpack.c.l.b16 %v320
          %v1063 = vunpack.c.l.b16 %v321
          %v1064 = vunpack.c.l.b16 %v322
          %v1065 = vunpack.c.l.b16 %v323
          %v1066 = vunpack.c.l.b16 %v324
          %v1067 = vunpack.c.l.b16 %v325
          %v1068 = vunpack.c.l.b16 %v326
          %v1069 = vunpack.c.l.b16 %v327
          %v1070 = vpack.c.b16 %v1055, %v1054
          %v1071 = vpack.c.b16 %v1057, %v1056
          %v1072 = vpack.c.b16 %v1059, %v1058
          %v1073 = vpack.c.b16 %v1061, %v1060
          %v1074 = vpack.c.b16 %v1063, %v1062
          %v1075 = vpack.c.b16 %v1065, %v1064
          %v1076 = vpack.c.b16 %v1067, %v1066
          %v1077 = vpack.c.b16 %v1069, %v1068
          %v1102 = vunpack.c.l.b16 %v1022
          %v1103 = vunpack.c.l.b16 %v1023
          %v1104 = vunpack.c.l.b16 %v1024
          %v1105 = vunpack.c.l.b16 %v1025
          %v1106 = vunpack.c.l.b16 %v1026
          %v1107 = vunpack.c.l.b16 %v1027
          %v1108 = vunpack.c.l.b16 %v1028
          %v1109 = vunpack.c.l.b16 %v1029
          %v1110 = vunpack.c.l.b16 %v1030
          %v1111 = vunpack.c.l.b16 %v1031
          %v1112 = vunpack.c.l.b16 %v1032
          %v1113 = vunpack.c.l.b16 %v1033
          %v1114 = vunpack.c.l.b16 %v1034
          %v1115 = vunpack.c.l.b16 %v1035
          %v1116 = vunpack.c.l.b16 %v1036
          %v1117 = vunpack.c.l.b16 %v1037
          %v1118 = vpack.c.b16 %v1103, %v1102
          %v1119 = vpack.c.b16 %v1105, %v1104
          %v1120 = vpack.c.b16 %v1107, %v1106
          %v1121 = vpack.c.b16 %v1109, %v1108
          %v1122 = vpack.c.b16 %v1111, %v1110
          %v1123 = vpack.c.b16 %v1113, %v1112
          %v1124 = vpack.c.b16 %v1115, %v1114
          %v1125 = vpack.c.b16 %v1117, %v1116
          %1134 = vmatpush.bf16.msra.mxu0 %v1125
          %1135 = vmatpush.bf16.msra.mxu0 %v1124
          %1136 = vmatpush.bf16.msra.mxu0 %v1123
          %1137 = vmatpush.bf16.msra.mxu0 %v1122
          %1138 = vmatpush.bf16.msra.mxu0 %v1121
          %1139 = vmatpush.bf16.msra.mxu0 %v1120
          %1140 = vmatpush.bf16.msra.mxu0 %v1119
          %1141 = vmatpush.bf16.msra.mxu0 %v1118
          %1142 = vmatmul.bf16.gmra.mxu0 %v1070
          %v1143 = vpop.f32.mrf.mxu0
          %v1144 = vadd.f32 0.0, %v1143
          %v1145 = vpop.f32.mrf.mxu0
          %v1146 = vadd.f32 0.0, %v1145
          %1147 = vmatmul.bf16.gmra.mxu0 %v1071
          %v1148 = vpop.f32.mrf.mxu0
          %v1149 = vadd.f32 0.0, %v1148
          %v1150 = vpop.f32.mrf.mxu0
          %v1151 = vadd.f32 0.0, %v1150
          %1152 = vmatmul.bf16.gmra.mxu0 %v1072
          %v1153 = vpop.f32.mrf.mxu0
          %v1154 = vadd.f32 0.0, %v1153
          %v1155 = vpop.f32.mrf.mxu0
          %v1156 = vadd.f32 0.0, %v1155
          %1157 = vmatmul.bf16.gmra.mxu0 %v1073
          %v1158 = vpop.f32.mrf.mxu0
          %v1159 = vadd.f32 0.0, %v1158
          %v1160 = vpop.f32.mrf.mxu0
          %v1161 = vadd.f32 0.0, %v1160
          %1162 = vmatmul.bf16.gmra.mxu0 %v1074
          %v1163 = vpop.f32.mrf.mxu0
          %v1164 = vadd.f32 0.0, %v1163
          %v1165 = vpop.f32.mrf.mxu0
          %v1166 = vadd.f32 0.0, %v1165
          %1167 = vmatmul.bf16.gmra.mxu0 %v1075
          %v1168 = vpop.f32.mrf.mxu0
          %v1169 = vadd.f32 0.0, %v1168
          %v1170 = vpop.f32.mrf.mxu0
          %v1171 = vadd.f32 0.0, %v1170
          %1172 = vmatmul.bf16.gmra.mxu0 %v1076
          %v1173 = vpop.f32.mrf.mxu0
          %v1174 = vadd.f32 0.0, %v1173
          %v1175 = vpop.f32.mrf.mxu0
          %v1176 = vadd.f32 0.0, %v1175
          %1177 = vmatmul.bf16.gmra.mxu0 %v1077
          %v1178 = vpop.f32.mrf.mxu0
          %v1179 = vadd.f32 0.0, %v1178
          %v1180 = vpop.f32.mrf.mxu0
          %v1181 = vadd.f32 0.0, %v1180
          %1182 = vdwg.mxu0
          %1184 = vset.pattern.permute.xlu0 0
          %1185 = vperm.xlu0 %1184, %v328
          %v1186 = vpop.permute.xlu0 %1185
          %1189 = vset.pattern.permute.xlu0 0
          %1190 = vperm.xlu0 %1189, %v329
          %v1191 = vpop.permute.xlu0 %1190
          %1194 = vset.pattern.permute.xlu0 0
          %1195 = vperm.xlu0 %1194, %v330
          %v1196 = vpop.permute.xlu0 %1195
          %1199 = vset.pattern.permute.xlu0 0
          %1200 = vperm.xlu0 %1199, %v331
          %v1201 = vpop.permute.xlu0 %1200
          %1204 = vset.pattern.permute.xlu0 0
          %1205 = vperm.xlu0 %1204, %v332
          %v1206 = vpop.permute.xlu0 %1205
          %1209 = vset.pattern.permute.xlu0 0
          %1210 = vperm.xlu0 %1209, %v333
          %v1211 = vpop.permute.xlu0 %1210
          %1214 = vset.pattern.permute.xlu0 0
          %1215 = vperm.xlu0 %1214, %v334
          %v1216 = vpop.permute.xlu0 %1215
          %1219 = vset.pattern.permute.xlu0 0
          %1220 = vperm.xlu0 %1219, %v335
          %v1221 = vpop.permute.xlu0 %1220
          %1224 = vset.pattern.permute.xlu0 0
          %1225 = vperm.xlu0 %1224, %v336
          %v1226 = vpop.permute.xlu0 %1225
          %1229 = vset.pattern.permute.xlu0 0
          %1230 = vperm.xlu0 %1229, %v337
          %v1231 = vpop.permute.xlu0 %1230
          %1234 = vset.pattern.permute.xlu0 0
          %1235 = vperm.xlu0 %1234, %v338
          %v1236 = vpop.permute.xlu0 %1235
          %1239 = vset.pattern.permute.xlu0 0
          %1240 = vperm.xlu0 %1239, %v339
          %v1241 = vpop.permute.xlu0 %1240
          %1244 = vset.pattern.permute.xlu0 0
          %1245 = vperm.xlu0 %1244, %v340
          %v1246 = vpop.permute.xlu0 %1245
          %1249 = vset.pattern.permute.xlu0 0
          %1250 = vperm.xlu0 %1249, %v341
          %v1251 = vpop.permute.xlu0 %1250
          %1254 = vset.pattern.permute.xlu0 0
          %1255 = vperm.xlu0 %1254, %v342
          %v1256 = vpop.permute.xlu0 %1255
          %1259 = vset.pattern.permute.xlu0 0
          %1260 = vperm.xlu0 %1259, %v343
          %v1261 = vpop.permute.xlu0 %1260
          %v1263 = vmul.f32 %v1144, %v1186
          %v1264 = vmul.f32 %v1146, %v1191
          %v1265 = vmul.f32 %v1149, %v1196
          %v1266 = vmul.f32 %v1151, %v1201
          %v1267 = vmul.f32 %v1154, %v1206
          %v1268 = vmul.f32 %v1156, %v1211
          %v1269 = vmul.f32 %v1159, %v1216
          %v1270 = vmul.f32 %v1161, %v1221
          %v1271 = vmul.f32 %v1164, %v1226
          %v1272 = vmul.f32 %v1166, %v1231
          %v1273 = vmul.f32 %v1169, %v1236
          %v1274 = vmul.f32 %v1171, %v1241
          %v1275 = vmul.f32 %v1174, %v1246
          %v1276 = vmul.f32 %v1176, %v1251
          %v1277 = vmul.f32 %v1179, %v1256
          %v1278 = vmul.f32 %v1181, %v1261
          %s1279 = sshra.s32 %s311, 3
          %s1280 = sand.u32 %s311, 7
          %s1281 = smul.addr %s1279, 4
          %s1282 = scalar_lea.vmem [#allocation2], %s1281
          %v1283 = vld [vmem:[%s1282] sm:$0xf]
          %v1284 = vld [vmem:[%s1282 + $0x4] sm:$0xf]
          %v1285 = vld [vmem:[%s1282 + $0x8] sm:$0xf]
          %v1286 = vld [vmem:[%s1282 + $0xc] sm:$0xf]
          %v1287 = vld [vmem:[%s1282 + $0x10] sm:$0xf]
          %v1288 = vld [vmem:[%s1282 + $0x14] sm:$0xf]
          %v1289 = vld [vmem:[%s1282 + $0x18] sm:$0xf]
          %v1290 = vld [vmem:[%s1282 + $0x1c] sm:$0xf]
          %v1291 = vld [vmem:[%s1282 + $0x20] sm:$0xf]
          %v1292 = vld [vmem:[%s1282 + $0x24] sm:$0xf]
          %v1293 = vld [vmem:[%s1282 + $0x28] sm:$0xf]
          %v1294 = vld [vmem:[%s1282 + $0x2c] sm:$0xf]
          %v1295 = vld [vmem:[%s1282 + $0x30] sm:$0xf]
          %v1296 = vld [vmem:[%s1282 + $0x34] sm:$0xf]
          %v1297 = vld [vmem:[%s1282 + $0x38] sm:$0xf]
          %v1298 = vld [vmem:[%s1282 + $0x3c] sm:$0xf]
          %v1299 = vpack.c.bf16 %v1263, %v1263
          %v1300 = vpack.c.bf16 %v1264, %v1264
          %v1301 = vpack.c.bf16 %v1265, %v1265
          %v1302 = vpack.c.bf16 %v1266, %v1266
          %v1303 = vpack.c.bf16 %v1267, %v1267
          %v1304 = vpack.c.bf16 %v1268, %v1268
          %v1305 = vpack.c.bf16 %v1269, %v1269
          %v1306 = vpack.c.bf16 %v1270, %v1270
          %v1307 = vpack.c.bf16 %v1271, %v1271
          %v1308 = vpack.c.bf16 %v1272, %v1272
          %v1309 = vpack.c.bf16 %v1273, %v1273
          %v1310 = vpack.c.bf16 %v1274, %v1274
          %v1311 = vpack.c.bf16 %v1275, %v1275
          %v1312 = vpack.c.bf16 %v1276, %v1276
          %v1313 = vpack.c.bf16 %v1277, %v1277
          %v1314 = vpack.c.bf16 %v1278, %v1278
          %v1331 = vunpack.c.l.b16 %v1283
          %v1332 = vunpack.c.l.b16 %v1284
          %v1333 = vunpack.c.l.b16 %v1285
          %v1334 = vunpack.c.l.b16 %v1286
          %v1335 = vunpack.c.l.b16 %v1287
          %v1336 = vunpack.c.l.b16 %v1288
          %v1337 = vunpack.c.l.b16 %v1289
          %v1338 = vunpack.c.l.b16 %v1290
          %v1339 = vunpack.c.l.b16 %v1291
          %v1340 = vunpack.c.l.b16 %v1292
          %v1341 = vunpack.c.l.b16 %v1293
          %v1342 = vunpack.c.l.b16 %v1294
          %v1343 = vunpack.c.l.b16 %v1295
          %v1344 = vunpack.c.l.b16 %v1296
          %v1345 = vunpack.c.l.b16 %v1297
          %v1346 = vunpack.c.l.b16 %v1298
          %v1347 = vpack.c.b16 %v1332, %v1331
          %v1348 = vpack.c.b16 %v1334, %v1333
          %v1349 = vpack.c.b16 %v1336, %v1335
          %v1350 = vpack.c.b16 %v1338, %v1337
          %v1351 = vpack.c.b16 %v1340, %v1339
          %v1352 = vpack.c.b16 %v1342, %v1341
          %v1353 = vpack.c.b16 %v1344, %v1343
          %v1354 = vpack.c.b16 %v1346, %v1345
          %v1379 = vunpack.c.l.b16 %v1299
          %v1380 = vunpack.c.l.b16 %v1300
          %v1381 = vunpack.c.l.b16 %v1301
          %v1382 = vunpack.c.l.b16 %v1302
          %v1383 = vunpack.c.l.b16 %v1303
          %v1384 = vunpack.c.l.b16 %v1304
          %v1385 = vunpack.c.l.b16 %v1305
          %v1386 = vunpack.c.l.b16 %v1306
          %v1387 = vunpack.c.l.b16 %v1307
          %v1388 = vunpack.c.l.b16 %v1308
          %v1389 = vunpack.c.l.b16 %v1309
          %v1390 = vunpack.c.l.b16 %v1310
          %v1391 = vunpack.c.l.b16 %v1311
          %v1392 = vunpack.c.l.b16 %v1312
          %v1393 = vunpack.c.l.b16 %v1313
          %v1394 = vunpack.c.l.b16 %v1314
          %v1395 = vpack.c.b16 %v1380, %v1379
          %v1396 = vpack.c.b16 %v1382, %v1381
          %v1397 = vpack.c.b16 %v1384, %v1383
          %v1398 = vpack.c.b16 %v1386, %v1385
          %v1399 = vpack.c.b16 %v1388, %v1387
          %v1400 = vpack.c.b16 %v1390, %v1389
          %v1401 = vpack.c.b16 %v1392, %v1391
          %v1402 = vpack.c.b16 %v1394, %v1393
          %v1411 = vld [vmem:[#allocation9] sm:$0xf]
          %v1412 = vld [vmem:[#allocation9 + $0x4] sm:$0xf]
          %v1413 = vld [vmem:[#allocation9 + $0x8] sm:$0xf]
          %v1414 = vld [vmem:[#allocation9 + $0xc] sm:$0xf]
          %v1415 = vld [vmem:[#allocation9 + $0x10] sm:$0xf]
          %v1416 = vld [vmem:[#allocation9 + $0x14] sm:$0xf]
          %v1417 = vld [vmem:[#allocation9 + $0x18] sm:$0xf]
          %v1418 = vld [vmem:[#allocation9 + $0x1c] sm:$0xf]
          %v1419 = vld [vmem:[#allocation9 + $0x20] sm:$0xf]
          %v1420 = vld [vmem:[#allocation9 + $0x24] sm:$0xf]
          %v1421 = vld [vmem:[#allocation9 + $0x28] sm:$0xf]
          %v1422 = vld [vmem:[#allocation9 + $0x2c] sm:$0xf]
          %v1423 = vld [vmem:[#allocation9 + $0x30] sm:$0xf]
          %v1424 = vld [vmem:[#allocation9 + $0x34] sm:$0xf]
          %v1425 = vld [vmem:[#allocation9 + $0x38] sm:$0xf]
          %v1426 = vld [vmem:[#allocation9 + $0x3c] sm:$0xf]
          %v1427 = vld [vmem:[#allocation9 + $0x40] sm:$0xf]
          %v1428 = vld [vmem:[#allocation9 + $0x44] sm:$0xf]
          %v1429 = vld [vmem:[#allocation9 + $0x48] sm:$0xf]
          %v1430 = vld [vmem:[#allocation9 + $0x4c] sm:$0xf]
          %v1431 = vld [vmem:[#allocation9 + $0x50] sm:$0xf]
          %v1432 = vld [vmem:[#allocation9 + $0x54] sm:$0xf]
          %v1433 = vld [vmem:[#allocation9 + $0x58] sm:$0xf]
          %v1434 = vld [vmem:[#allocation9 + $0x5c] sm:$0xf]
          %v1435 = vld [vmem:[#allocation9 + $0x60] sm:$0xf]
          %v1436 = vld [vmem:[#allocation9 + $0x64] sm:$0xf]
          %v1437 = vld [vmem:[#allocation9 + $0x68] sm:$0xf]
          %v1438 = vld [vmem:[#allocation9 + $0x6c] sm:$0xf]
          %v1439 = vld [vmem:[#allocation9 + $0x70] sm:$0xf]
          %v1440 = vld [vmem:[#allocation9 + $0x74] sm:$0xf]
          %v1441 = vld [vmem:[#allocation9 + $0x78] sm:$0xf]
          %v1442 = vld [vmem:[#allocation9 + $0x7c] sm:$0xf]
          %v1475 = vunpack.c.l.b16 %v1411
          %v1476 = vunpack.c.l.b16 %v1412
          %v1477 = vunpack.c.l.b16 %v1413
          %v1478 = vunpack.c.l.b16 %v1414
          %v1479 = vunpack.c.l.b16 %v1415
          %v1480 = vunpack.c.l.b16 %v1416
          %v1481 = vunpack.c.l.b16 %v1417
          %v1482 = vunpack.c.l.b16 %v1418
          %v1483 = vunpack.c.l.b16 %v1419
          %v1484 = vunpack.c.l.b16 %v1420
          %v1485 = vunpack.c.l.b16 %v1421
          %v1486 = vunpack.c.l.b16 %v1422
          %v1487 = vunpack.c.l.b16 %v1423
          %v1488 = vunpack.c.l.b16 %v1424
          %v1489 = vunpack.c.l.b16 %v1425
          %v1490 = vunpack.c.l.b16 %v1426
          %v1491 = vunpack.c.l.b16 %v1427
          %v1492 = vunpack.c.l.b16 %v1428
          %v1493 = vunpack.c.l.b16 %v1429
          %v1494 = vunpack.c.l.b16 %v1430
          %v1495 = vunpack.c.l.b16 %v1431
          %v1496 = vunpack.c.l.b16 %v1432
          %v1497 = vunpack.c.l.b16 %v1433
          %v1498 = vunpack.c.l.b16 %v1434
          %v1499 = vunpack.c.l.b16 %v1435
          %v1500 = vunpack.c.l.b16 %v1436
          %v1501 = vunpack.c.l.b16 %v1437
          %v1502 = vunpack.c.l.b16 %v1438
          %v1503 = vunpack.c.l.b16 %v1439
          %v1504 = vunpack.c.l.b16 %v1440
          %v1505 = vunpack.c.l.b16 %v1441
          %v1506 = vunpack.c.l.b16 %v1442
          %v1507 = vpack.c.b16 %v1476, %v1475
          %v1508 = vpack.c.b16 %v1478, %v1477
          %v1509 = vpack.c.b16 %v1480, %v1479
          %v1510 = vpack.c.b16 %v1482, %v1481
          %v1511 = vpack.c.b16 %v1484, %v1483
          %v1512 = vpack.c.b16 %v1486, %v1485
          %v1513 = vpack.c.b16 %v1488, %v1487
          %v1514 = vpack.c.b16 %v1490, %v1489
          %v1515 = vpack.c.b16 %v1492, %v1491
          %v1516 = vpack.c.b16 %v1494, %v1493
          %v1517 = vpack.c.b16 %v1496, %v1495
          %v1518 = vpack.c.b16 %v1498, %v1497
          %v1519 = vpack.c.b16 %v1500, %v1499
          %v1520 = vpack.c.b16 %v1502, %v1501
          %v1521 = vpack.c.b16 %v1504, %v1503
          %v1522 = vpack.c.b16 %v1506, %v1505
          %1539 = vmatpush.bf16.msra.mxu0 %v1514
          %1540 = vmatpush.bf16.msra.mxu0 %v1513
          %1541 = vmatpush.bf16.msra.mxu0 %v1512
          %1542 = vmatpush.bf16.msra.mxu0 %v1511
          %1543 = vmatpush.bf16.msra.mxu0 %v1510
          %1544 = vmatpush.bf16.msra.mxu0 %v1509
          %1545 = vmatpush.bf16.msra.mxu0 %v1508
          %1546 = vmatpush.bf16.msra.mxu0 %v1507
          %1547 = vmatmul.bf16.gmra.mxu0 %v1347
          %v1548 = vpop.f32.mrf.mxu0
          %v1549 = vadd.f32 0.0, %v1548
          %v1550 = vpop.f32.mrf.mxu0
          %v1551 = vadd.f32 0.0, %v1550
          %1552 = vmatmul.bf16.gmra.mxu0 %v1348
          %v1553 = vpop.f32.mrf.mxu0
          %v1554 = vadd.f32 0.0, %v1553
          %v1555 = vpop.f32.mrf.mxu0
          %v1556 = vadd.f32 0.0, %v1555
          %1557 = vmatmul.bf16.gmra.mxu0 %v1349
          %v1558 = vpop.f32.mrf.mxu0
          %v1559 = vadd.f32 0.0, %v1558
          %v1560 = vpop.f32.mrf.mxu0
          %v1561 = vadd.f32 0.0, %v1560
          %1562 = vmatmul.bf16.gmra.mxu0 %v1350
          %v1563 = vpop.f32.mrf.mxu0
          %v1564 = vadd.f32 0.0, %v1563
          %v1565 = vpop.f32.mrf.mxu0
          %v1566 = vadd.f32 0.0, %v1565
          %1567 = vmatmul.bf16.gmra.mxu0 %v1351
          %v1568 = vpop.f32.mrf.mxu0
          %v1569 = vadd.f32 0.0, %v1568
          %v1570 = vpop.f32.mrf.mxu0
          %v1571 = vadd.f32 0.0, %v1570
          %1572 = vmatmul.bf16.gmra.mxu0 %v1352
          %v1573 = vpop.f32.mrf.mxu0
          %v1574 = vadd.f32 0.0, %v1573
          %v1575 = vpop.f32.mrf.mxu0
          %v1576 = vadd.f32 0.0, %v1575
          %1577 = vmatmul.bf16.gmra.mxu0 %v1353
          %v1578 = vpop.f32.mrf.mxu0
          %v1579 = vadd.f32 0.0, %v1578
          %v1580 = vpop.f32.mrf.mxu0
          %v1581 = vadd.f32 0.0, %v1580
          %1582 = vmatmul.bf16.gmra.mxu0 %v1354
          %v1583 = vpop.f32.mrf.mxu0
          %v1584 = vadd.f32 0.0, %v1583
          %v1585 = vpop.f32.mrf.mxu0
          %v1586 = vadd.f32 0.0, %v1585
          %1587 = vdwg.mxu0
          %1588 = vmatpush.bf16.msra.mxu0 %v1522
          %1589 = vmatpush.bf16.msra.mxu0 %v1521
          %1590 = vmatpush.bf16.msra.mxu0 %v1520
          %1591 = vmatpush.bf16.msra.mxu0 %v1519
          %1592 = vmatpush.bf16.msra.mxu0 %v1518
          %1593 = vmatpush.bf16.msra.mxu0 %v1517
          %1594 = vmatpush.bf16.msra.mxu0 %v1516
          %1595 = vmatpush.bf16.msra.mxu0 %v1515
          %1596 = vmatmul.bf16.gmra.mxu0 %v1395
          %v1597 = vpop.f32.mrf.mxu0
          %v1598 = vadd.f32 %v1549, %v1597
          %v1599 = vpop.f32.mrf.mxu0
          %v1600 = vadd.f32 %v1551, %v1599
          %1601 = vmatmul.bf16.gmra.mxu0 %v1396
          %v1602 = vpop.f32.mrf.mxu0
          %v1603 = vadd.f32 %v1554, %v1602
          %v1604 = vpop.f32.mrf.mxu0
          %v1605 = vadd.f32 %v1556, %v1604
          %1606 = vmatmul.bf16.gmra.mxu0 %v1397
          %v1607 = vpop.f32.mrf.mxu0
          %v1608 = vadd.f32 %v1559, %v1607
          %v1609 = vpop.f32.mrf.mxu0
          %v1610 = vadd.f32 %v1561, %v1609
          %1611 = vmatmul.bf16.gmra.mxu0 %v1398
          %v1612 = vpop.f32.mrf.mxu0
          %v1613 = vadd.f32 %v1564, %v1612
          %v1614 = vpop.f32.mrf.mxu0
          %v1615 = vadd.f32 %v1566, %v1614
          %1616 = vmatmul.bf16.gmra.mxu0 %v1399
          %v1617 = vpop.f32.mrf.mxu0
          %v1618 = vadd.f32 %v1569, %v1617
          %v1619 = vpop.f32.mrf.mxu0
          %v1620 = vadd.f32 %v1571, %v1619
          %1621 = vmatmul.bf16.gmra.mxu0 %v1400
          %v1622 = vpop.f32.mrf.mxu0
          %v1623 = vadd.f32 %v1574, %v1622
          %v1624 = vpop.f32.mrf.mxu0
          %v1625 = vadd.f32 %v1576, %v1624
          %1626 = vmatmul.bf16.gmra.mxu0 %v1401
          %v1627 = vpop.f32.mrf.mxu0
          %v1628 = vadd.f32 %v1579, %v1627
          %v1629 = vpop.f32.mrf.mxu0
          %v1630 = vadd.f32 %v1581, %v1629
          %1631 = vmatmul.bf16.gmra.mxu0 %v1402
          %v1632 = vpop.f32.mrf.mxu0
          %v1633 = vadd.f32 %v1584, %v1632
          %v1634 = vpop.f32.mrf.mxu0
          %v1635 = vadd.f32 %v1586, %v1634
          %1636 = vdwg.mxu0
          %v1637 = vld [vmem:[#allocation3] sm:$0x1]
          %v1638 = vadd.f32 %v1598, %v1600
          %v1639 = vadd.f32 %v1638, %v1603
          %v1640 = vadd.f32 %v1639, %v1605
          %v1641 = vadd.f32 %v1640, %v1608
          %v1642 = vadd.f32 %v1641, %v1610
          %v1643 = vadd.f32 %v1642, %v1613
          %v1644 = vadd.f32 %v1643, %v1615
          %v1645 = vadd.f32 %v1644, %v1618
          %v1646 = vadd.f32 %v1645, %v1620
          %v1647 = vadd.f32 %v1646, %v1623
          %v1648 = vadd.f32 %v1647, %v1625
          %v1649 = vadd.f32 %v1648, %v1628
          %v1650 = vadd.f32 %v1649, %v1630
          %v1651 = vadd.f32 %v1650, %v1633
          %v1652 = vadd.f32 %v1651, %v1635
          %v1653 = vrot.slane %v1652, 4
          %v1654 = vadd.f32 %v1652, %v1653
          %v1655 = vrot.slane %v1654, 2
          %v1656 = vadd.f32 %v1654, %v1655
          %v1657 = vrot.slane %v1656, 1
          %v1658 = vadd.f32 %v1656, %v1657
          %v1659 = vadd.f32 %v1637, %v1658
          %1660 = vst [vmem:[#allocation3] sm:$0x1] %v1659
          // Predicated region
          $region69: #{tpu_custom_call.1} parent=63 // pred_check
            %p1661 = pneg %p1017
          $region70: #{tpu_custom_call.1} parent=63 // pred_check_branch
            %1663 = sbr.rel (%p1661) target = $region72
          $region71: #{tpu_custom_call.1} parent=63 // pred_region
            %v1664 = vld [vmem:[#allocation3] sm:$0x1]
            %v1665 = vld [vmem:[%s5] sm:$0x1]
            %v1666 = vmul.f32 %v1664, %v1665
            %vm1667 = vcmask 1040384
            %v1668 = vsel %vm1667, %v1666, 0.0
            %1669 = vadd.xlane.f32.xlu0 %v1668
            %v1670 = vpop.xlane.xlu0 %1669
            %v1671 = vsub.f32 0.0, %v1670
            %v1672 = vmul.f32 %v1671, 1.442695
            %v1673 = vpow.pop %v1672
            %v1674 = vadd.f32 %v1673, 1.0
            %v1675 = vrcp.pop %v1674
            %vm1676 = vcmask 0
            %1677 = vst.msk [vmem:[#allocation10] sm:$0x1] %vm1676, %v1675
          $region72: #{tpu_custom_call.1} parent=63 // pred_fallthru
            _
        $region64: #{tpu_custom_call.1} parent=43 // pred_fallthru
          _
        // Predicated region
        $region73: #{tpu_custom_call.1} parent=43 // pred_check
          %p1678 = pneg %p181
        $region74: #{tpu_custom_call.1} parent=43 // pred_check_branch
          %1680 = sbr.rel (%p1678) target = $region76
        $region75: #{tpu_custom_call.1} parent=43 // pred_region
          %1682 = vsyncadd [#allocation6], 0
          %s1684 = sshll.u32 [#allocation10], 4
          %s1685 = int_to_ptr.vmem [resolvable:$true] %s1684
          %s1686 = sshll.u32 %s6, 4
          %s1687 = int_to_ptr.hbm [resolvable:$true] %s1686
          %1689 = dma.vmem_to_hbm [thread:$0]  %s1685, 16, %s1687, [#allocation6]
        $region76: #{tpu_custom_call.1} parent=43 // pred_fallthru
          _
        // Predicated region
        $region77: #{tpu_custom_call.1} parent=43 // pred_check
          %p1690 = pneg %p181
        $region78: #{tpu_custom_call.1} parent=43 // pred_check_branch
          %1692 = sbr.rel (%p1690) target = $region80
        $region79: #{tpu_custom_call.1} parent=43 // pred_region
          %1694 = dma.done [#allocation6], 16
        $region80: #{tpu_custom_call.1} parent=43 // pred_fallthru
          _
      $region44: #{tpu_custom_call.1} parent=5 // pred_fallthru
        _
      %p1695 = scmp.le.s32.totalorder 2, %s15
      // Predicated region
      $region81: #{tpu_custom_call.1} parent=5 // pred_check
        %p1696 = pneg %p1695
      $region82: #{tpu_custom_call.1} parent=5 // pred_check_branch
        %1698 = sbr.rel (%p1696) target = $region84
      $region83: #{tpu_custom_call.1} parent=5 // pred_region
        %s1699 = ssub.s32 %s15, 2
      $region84: #{tpu_custom_call.1} parent=5 // pred_fallthru
        _
    $region6: #{tpu_custom_call.1} parent=1 // loop_footer
      %s19 = sadd.s32 1, %s15
    $region7: #{tpu_custom_call.1} parent=1 // loop_footer_branch
      %14 = sbr.rel target = $region3
    $region8: #{tpu_custom_call.1} parent=1 // loop_exit
      _
    %1700 = vsyncpa [#allocation5], 1
    %s1701 = scalar_lea.sflag [#allocation5], 1
    %1702 = vsyncpa %s1701, 1
    %1703 = vsyncpa [#allocation8], 1
    %1704 = vsyncpa [#allocation6], 1
    %s1705 = scalar_lea.sflag [#allocation6], 1
    %1706 = vsyncpa %s1705, 1

</llo_original>
